<compile_context>
chip_gen: v7x
topology: tpu7x:2x2x1
jax: 0.10.0
libtpu: 0.0.40
codegen_flags: <defaults>
</compile_context>

<pallas_src>
import functools

import jax
import jax.numpy as jnp
import numpy as np
from jax.experimental import pallas as pl
from jax.experimental.pallas import tpu as pltpu


# ----------------------------------------------------------------------------
# Pallas kernel: one batch element per grid step, tokens-in-lanes layout.
# ----------------------------------------------------------------------------
def _lmsa_kernel(x_ref, wqkv_ref, wproj_ref, bproj_ref, bias_ref, o_ref,
                 *, num_heads, head_dim):
    C = num_heads * head_dim

    # Fused QKV projection, left-multiplied so tokens stay in lanes:
    # (3C, C) @ (C, N) -> (3C, N).  bf16 operands on the MXU, f32 accumulation.
    qkv = jnp.dot(wqkv_ref[...], x_ref[...],
                  preferred_element_type=jnp.float32)          # (3C, N) f32
    bias = bias_ref[...]                                       # (N, N)  f32

    ctx_rows = []
    for h in range(num_heads):
        r = h * head_dim
        # Per-head q/k/v are 8-row sublane slices of qkv (free; no lane slices).
        q_t = qkv[r:r + head_dim, :]                           # (d, N)
        k_t = qkv[C + r:C + r + head_dim, :]                   # (d, N)
        v_t = qkv[2 * C + r:2 * C + r + head_dim, :]           # (d, N)

        # Scores (Nq, Nk): one small XLU transpose of q, then a standard MXU
        # dot with bf16 operands and f32 accumulation.
        q_row = q_t.T.astype(jnp.bfloat16)                     # (N, d)
        s = jnp.dot(q_row, k_t.astype(jnp.bfloat16),
                    preferred_element_type=jnp.float32)        # (N, N)
        s = s + bias

        # Softmax over keys — all elementwise math in f32, denom on the EUP.
        m = jnp.max(s, axis=-1, keepdims=True)
        e = jnp.exp(s - m)
        denom = jnp.sum(e, axis=-1, keepdims=True)
        p = e * pl.reciprocal(denom, approx=True)              # softmax(dim=-1)

        # ctx^T (d, Nq) = v^T (d, Nk) contracted with p (Nq, Nk) over Nk
        # (rhs-transposed matmul, MXU-native).
        ctx_rows.append(jax.lax.dot_general(
            v_t.astype(jnp.bfloat16), p.astype(jnp.bfloat16),
            (((1,), (1,)), ((), ())),
            preferred_element_type=jnp.float32))               # (d, N)

    ctx_t = jnp.concatenate(ctx_rows, axis=0)                  # (C, N) sublane concat

    # Output projection, still tokens-in-lanes: (C, C) @ (C, N) + (C, 1).
    out_t = jnp.dot(wproj_ref[...], ctx_t.astype(jnp.bfloat16),
                    preferred_element_type=jnp.float32) + bproj_ref[...]
    o_ref[...] = out_t.astype(o_ref.dtype)


# ----------------------------------------------------------------------------
# One-time parameter preparation (pure index/layout glue, done at init time).
# ----------------------------------------------------------------------------
def prepare_lmsa_params(params, *, num_heads, n_tokens):
    wq, wkv, wproj, bproj = (params["wq"], params["wkv"],
                             params["wproj"], params["bproj"])
    pos_emb, rel_idx = params["pos_emb"], params["rel_idx"]
    C = wq.shape[0]
    head_dim = C // num_heads
    scale = head_dim ** (-0.5)

    # Reproduce the einops '(dim h l)' kv output-channel ordering by permuting
    # rows of Wkv so kernel-side rows are [k (head-major) | v (head-major)].
    dh_i, h_i, l_i = np.meshgrid(np.arange(head_dim), np.arange(num_heads),
                                 np.arange(2), indexing="ij")
    orig = dh_i * (num_heads * 2) + h_i * 2 + l_i              # (d, h, 2)
    perm = np.transpose(orig, (2, 1, 0)).reshape(-1)           # order: l, h, d
    wkv_perm = wkv[perm, :]                                    # (2C, C)

    # Fused (3C, C) weight for the left-multiplied tokens-in-lanes projection
    # qkv^T = Wqkv @ x^T; softmax scale folded into the q rows (zero kernel
    # cost); cast to bf16 so the MXU streams bf16 operands.
    wqkv = jnp.concatenate([wq * scale, wkv_perm], axis=0)     # (3C, C)

    # Relative-position bias gather done once here, not per forward call.
    bias = pos_emb[rel_idx[:, :, 0], rel_idx[:, :, 1]][:, :n_tokens]

    return {
        "wqkv": wqkv.astype(jnp.bfloat16),                     # (3C, C) bf16
        "wproj": wproj.astype(jnp.bfloat16),                   # out^T = Wproj @ ctx^T
        "bproj": bproj.reshape(C, 1).astype(jnp.float32),      # (C, 1) f32
        "bias": bias.astype(jnp.float32),                      # (N, N) f32
    }


# ----------------------------------------------------------------------------
# Wrapper: pure reshapes (no transposes) + pallas_call with grid over batch.
# ----------------------------------------------------------------------------
def lmsa_forward(x_nchw, kparams, *, num_heads):
    B, C, H, W = x_nchw.shape
    N = H * W
    head_dim = C // num_heads

    # 'B C H W -> B C (H W)' — tokens land in the lane dimension; free reshape.
    x_t = x_nchw.reshape(B, C, N).astype(jnp.bfloat16)

    kernel = functools.partial(_lmsa_kernel, num_heads=num_heads,
                               head_dim=head_dim)

    out_t = pl.pallas_call(
        kernel,
        out_shape=jax.ShapeDtypeStruct((B, C, N), x_nchw.dtype),
        grid_spec=pltpu.PrefetchScalarGridSpec(
            num_scalar_prefetch=0,
            grid=(B,),
            in_specs=[
                pl.BlockSpec((None, C, N), lambda b: (b, 0, 0)),  # x^T tile (moves)
                pl.BlockSpec((3 * C, C), lambda b: (0, 0)),       # fused Wqkv (resident)
                pl.BlockSpec((C, C), lambda b: (0, 0)),           # Wproj (resident)
                pl.BlockSpec((C, 1), lambda b: (0, 0)),           # bproj (resident)
                pl.BlockSpec((N, N), lambda b: (0, 0)),           # rel-pos bias (resident)
            ],
            out_specs=pl.BlockSpec((None, C, N), lambda b: (b, 0, 0)),
        ),
        compiler_params=pltpu.CompilerParams(
            dimension_semantics=("parallel",)),   # batch shards across v7x's 2 TCs
    )(x_t, kparams["wqkv"], kparams["wproj"], kparams["bproj"],
      kparams["bias"])

    # 'B C (H W) -> B C H W' — free reshape.
    return out_t.reshape(B, C, H, W)


# ----------------------------------------------------------------------------
# Pure-JAX f32 reference mirroring the PyTorch forward (for verification).
# ----------------------------------------------------------------------------
def lmsa_reference(x_nchw, params, *, num_heads):
    B, C, H, W = x_nchw.shape
    N = H * W
    head_dim = C // num_heads
    scale = head_dim ** (-0.5)
    wq, wkv, wproj, bproj, pos_emb, rel_idx = (
        params["wq"], params["wkv"], params["wproj"], params["bproj"],
        params["pos_emb"], params["rel_idx"])

    x_q = jnp.transpose(x_nchw, (0, 2, 3, 1)).reshape(B, N, C)
    q = (x_q @ wq.T).reshape(B, N, num_heads, head_dim).transpose(0, 2, 1, 3)
    kv = x_q @ wkv.T                                        # (B, N, 2C)
    # 'B N (dim h l) -> l B h N dim'
    kv = kv.reshape(B, N, head_dim, num_heads, 2).transpose(4, 0, 3, 1, 2)
    k, v = kv[0], kv[1]
    attn = (q @ jnp.swapaxes(k, -2, -1)) * scale            # (B, h, N, N)
    bias = pos_emb[rel_idx[:, :, 0], rel_idx[:, :, 1]][:, :N]
    attn = attn + bias
    attn = jax.nn.softmax(attn, axis=-1)
    out = (attn @ v).transpose(0, 2, 1, 3).reshape(B, N, C)
    out = out @ wproj.T + bproj
    return jnp.transpose(out.reshape(B, H, W, C), (0, 3, 1, 2))


def generate_relative_distance(number_size):
    indices = np.array([[x, y] for x in range(number_size)
                        for y in range(number_size)])
    distances = indices[None, :, :] - indices[:, None, :]
    distances = distances + number_size - 1
    return distances  # (fs^2, fs^2, 2)


if __name__ == "__main__":
    B, C, H, W = 2, 32, 8, 8
    num_heads = 4
    features_size = H  # N = features_size**2 must equal H*W

    key = jax.random.PRNGKey(0)
    kx, kq, kkv, kp, kb, kpos = jax.random.split(key, 6)

    x = jax.random.normal(kx, (B, C, H, W), dtype=jnp.float32)

    # Deterministic synthetic parameters (Linear weight shape = (out, in)).
    params = {
        "wq": jax.random.normal(kq, (C, C), dtype=jnp.float32) * 0.05,
        "wkv": jax.random.normal(kkv, (2 * C, C), dtype=jnp.float32) * 0.05,
        "wproj": jax.random.normal(kp, (C, C), dtype=jnp.float32) * 0.05,
        "bproj": jax.random.normal(kb, (C,), dtype=jnp.float32) * 0.05,
        # relative position table (2*fs-1, 2*fs-1), trunc_normal(std=0.2) ~ normal
        "pos_emb": jax.random.normal(
            kpos, (2 * features_size - 1, 2 * features_size - 1),
            dtype=jnp.float32) * 0.2,
        "rel_idx": jnp.asarray(generate_relative_distance(features_size),
                               dtype=jnp.int32),
    }

    # One-time kernel-ready parameter prep (fused weights, bf16 cast, bias gather).
    kparams = prepare_lmsa_params(params, num_heads=num_heads, n_tokens=H * W)

    out = lmsa_forward(x, kparams, num_heads=num_heads)
    out = jax.block_until_ready(out)

    ref = lmsa_reference(x, params, num_heads=num_heads)
    # Tolerance relaxed vs the f32 reference because MXU operands are bf16
    # (per the perf review) and the softmax denominator uses the EUP
    # approximate reciprocal; all accumulation / softmax math remains f32.
    np.testing.assert_allclose(np.asarray(out), np.asarray(ref),
                               rtol=2e-2, atol=2e-2)
    assert out.shape == (B, C, H, W)

    print("KERNEL_OK")
</pallas_src>

<mosaic_0001>
module attributes {stable_mosaic.version = 11 : i64} {
  func.func @_lmsa_kernel(%arg0: i32, %arg1: memref<1x32x64xbf16, #tpu.memory_space<vmem>>, %arg2: memref<96x32xbf16, #tpu.memory_space<vmem>>, %arg3: memref<32x32xbf16, #tpu.memory_space<vmem>>, %arg4: memref<32x1xf32, #tpu.memory_space<vmem>>, %arg5: memref<64x64xf32, #tpu.memory_space<vmem>>, %arg6: memref<1x32x64xf32, #tpu.memory_space<vmem>>) attributes {dimension_semantics = [#tpu.dimension_semantics<parallel>], iteration_bounds = array<i64: 2>, scalar_prefetch = 0 : i64, scratch_operands = 0 : i64, tpu.core_type = #tpu.core_type<tc>, window_params = [{transform_indices = @transform_0, window_bounds = array<i64: 1, 32, 64>}, {pipeline_mode = #tpu.pipeline_mode<synchronous>, transform_indices = @transform_1, window_bounds = array<i64: 96, 32>}, {pipeline_mode = #tpu.pipeline_mode<synchronous>, transform_indices = @transform_2, window_bounds = array<i64: 32, 32>}, {pipeline_mode = #tpu.pipeline_mode<synchronous>, transform_indices = @transform_3, window_bounds = array<i64: 32, 1>}, {pipeline_mode = #tpu.pipeline_mode<synchronous>, transform_indices = @transform_4, window_bounds = array<i64: 64, 64>}, {transform_indices = @transform_5, window_bounds = array<i64: 1, 32, 64>}]} {
    %c0 = arith.constant 0 : index
    %c0_0 = arith.constant 0 : index
    %0 = vector.load %arg2[%c0, %c0_0] : memref<96x32xbf16, #tpu.memory_space<vmem>>, vector<96x32xbf16>
    %c0_1 = arith.constant 0 : index
    %c0_2 = arith.constant 0 : index
    %c0_3 = arith.constant 0 : index
    %1 = vector.load %arg1[%c0_1, %c0_2, %c0_3] : memref<1x32x64xbf16, #tpu.memory_space<vmem>>, vector<1x32x64xbf16>
    %2 = vector.shape_cast %1 : vector<1x32x64xbf16> to vector<32x64xbf16>
    %cst = arith.constant dense<0.000000e+00> : vector<96x64xf32>
    %3 = tpu.matmul %0, %2, %cst {dimension_numbers = #tpu.dot_dimension_numbers<[1], [0], [0], [1], [0, 0, 1, 1], [], []>} : vector<96x32xbf16>, vector<32x64xbf16>, vector<96x64xf32> -> vector<96x64xf32>
    %c0_4 = arith.constant 0 : index
    %c0_5 = arith.constant 0 : index
    %4 = vector.load %arg5[%c0_4, %c0_5] : memref<64x64xf32, #tpu.memory_space<vmem>>, vector<64x64xf32>
    %5 = vector.extract_strided_slice %3 {offsets = [0, 0], sizes = [8, 64], strides = [1, 1]} : vector<96x64xf32> to vector<8x64xf32>
    %6 = vector.extract_strided_slice %3 {offsets = [32, 0], sizes = [8, 64], strides = [1, 1]} : vector<96x64xf32> to vector<8x64xf32>
    %7 = vector.extract_strided_slice %3 {offsets = [64, 0], sizes = [8, 64], strides = [1, 1]} : vector<96x64xf32> to vector<8x64xf32>
    %8 = tpu.transpose %5, [1, 0] : vector<8x64xf32> -> vector<64x8xf32>
    %9 = arith.truncf %8 : vector<64x8xf32> to vector<64x8xbf16>
    %10 = arith.truncf %6 : vector<8x64xf32> to vector<8x64xbf16>
    %cst_6 = arith.constant dense<0.000000e+00> : vector<64x64xf32>
    %11 = tpu.matmul %9, %10, %cst_6 {dimension_numbers = #tpu.dot_dimension_numbers<[1], [0], [0], [1], [0, 0, 1, 1], [], []>} : vector<64x8xbf16>, vector<8x64xbf16>, vector<64x64xf32> -> vector<64x64xf32>
    %12 = arith.addf %11, %4 : vector<64x64xf32>
    %cst_7 = arith.constant dense<0xFF800000> : vector<64xf32>
    %13 = vector.multi_reduction <maximumf>, %12, %cst_7 [1] : vector<64x64xf32> to vector<64xf32>
    %14 = vector.shape_cast %13 : vector<64xf32> to vector<64x1xf32>
    %15 = vector.broadcast %14 : vector<64x1xf32> to vector<64x64xf32>
    %16 = arith.subf %12, %15 : vector<64x64xf32>
    %17 = math.exp %16 : vector<64x64xf32>
    %cst_8 = arith.constant dense<0.000000e+00> : vector<64xf32>
    %18 = vector.multi_reduction <add>, %17, %cst_8 [1] : vector<64x64xf32> to vector<64xf32>
    %19 = vector.shape_cast %18 : vector<64xf32> to vector<64x1xf32>
    %20 = tpu.reciprocal %19 {approx = true} : vector<64x1xf32> -> vector<64x1xf32>
    %21 = vector.broadcast %20 : vector<64x1xf32> to vector<64x64xf32>
    %22 = arith.mulf %17, %21 : vector<64x64xf32>
    %23 = arith.truncf %7 : vector<8x64xf32> to vector<8x64xbf16>
    %24 = arith.truncf %22 : vector<64x64xf32> to vector<64x64xbf16>
    %cst_9 = arith.constant dense<0.000000e+00> : vector<8x64xf32>
    %25 = tpu.matmul %23, %24, %cst_9 {dimension_numbers = #tpu.dot_dimension_numbers<[1], [1], [0], [0], [0, 0, 1, 0], [], []>} : vector<8x64xbf16>, vector<64x64xbf16>, vector<8x64xf32> -> vector<8x64xf32>
    %26 = vector.extract_strided_slice %3 {offsets = [8, 0], sizes = [8, 64], strides = [1, 1]} : vector<96x64xf32> to vector<8x64xf32>
    %27 = vector.extract_strided_slice %3 {offsets = [40, 0], sizes = [8, 64], strides = [1, 1]} : vector<96x64xf32> to vector<8x64xf32>
    %28 = vector.extract_strided_slice %3 {offsets = [72, 0], sizes = [8, 64], strides = [1, 1]} : vector<96x64xf32> to vector<8x64xf32>
    %29 = tpu.transpose %26, [1, 0] : vector<8x64xf32> -> vector<64x8xf32>
    %30 = arith.truncf %29 : vector<64x8xf32> to vector<64x8xbf16>
    %31 = arith.truncf %27 : vector<8x64xf32> to vector<8x64xbf16>
    %cst_10 = arith.constant dense<0.000000e+00> : vector<64x64xf32>
    %32 = tpu.matmul %30, %31, %cst_10 {dimension_numbers = #tpu.dot_dimension_numbers<[1], [0], [0], [1], [0, 0, 1, 1], [], []>} : vector<64x8xbf16>, vector<8x64xbf16>, vector<64x64xf32> -> vector<64x64xf32>
    %33 = arith.addf %32, %4 : vector<64x64xf32>
    %cst_11 = arith.constant dense<0xFF800000> : vector<64xf32>
    %34 = vector.multi_reduction <maximumf>, %33, %cst_11 [1] : vector<64x64xf32> to vector<64xf32>
    %35 = vector.shape_cast %34 : vector<64xf32> to vector<64x1xf32>
    %36 = vector.broadcast %35 : vector<64x1xf32> to vector<64x64xf32>
    %37 = arith.subf %33, %36 : vector<64x64xf32>
    %38 = math.exp %37 : vector<64x64xf32>
    %cst_12 = arith.constant dense<0.000000e+00> : vector<64xf32>
    %39 = vector.multi_reduction <add>, %38, %cst_12 [1] : vector<64x64xf32> to vector<64xf32>
    %40 = vector.shape_cast %39 : vector<64xf32> to vector<64x1xf32>
    %41 = tpu.reciprocal %40 {approx = true} : vector<64x1xf32> -> vector<64x1xf32>
    %42 = vector.broadcast %41 : vector<64x1xf32> to vector<64x64xf32>
    %43 = arith.mulf %38, %42 : vector<64x64xf32>
    %44 = arith.truncf %28 : vector<8x64xf32> to vector<8x64xbf16>
    %45 = arith.truncf %43 : vector<64x64xf32> to vector<64x64xbf16>
    %cst_13 = arith.constant dense<0.000000e+00> : vector<8x64xf32>
    %46 = tpu.matmul %44, %45, %cst_13 {dimension_numbers = #tpu.dot_dimension_numbers<[1], [1], [0], [0], [0, 0, 1, 0], [], []>} : vector<8x64xbf16>, vector<64x64xbf16>, vector<8x64xf32> -> vector<8x64xf32>
    %47 = vector.extract_strided_slice %3 {offsets = [16, 0], sizes = [8, 64], strides = [1, 1]} : vector<96x64xf32> to vector<8x64xf32>
    %48 = vector.extract_strided_slice %3 {offsets = [48, 0], sizes = [8, 64], strides = [1, 1]} : vector<96x64xf32> to vector<8x64xf32>
    %49 = vector.extract_strided_slice %3 {offsets = [80, 0], sizes = [8, 64], strides = [1, 1]} : vector<96x64xf32> to vector<8x64xf32>
    %50 = tpu.transpose %47, [1, 0] : vector<8x64xf32> -> vector<64x8xf32>
    %51 = arith.truncf %50 : vector<64x8xf32> to vector<64x8xbf16>
    %52 = arith.truncf %48 : vector<8x64xf32> to vector<8x64xbf16>
    %cst_14 = arith.constant dense<0.000000e+00> : vector<64x64xf32>
    %53 = tpu.matmul %51, %52, %cst_14 {dimension_numbers = #tpu.dot_dimension_numbers<[1], [0], [0], [1], [0, 0, 1, 1], [], []>} : vector<64x8xbf16>, vector<8x64xbf16>, vector<64x64xf32> -> vector<64x64xf32>
    %54 = arith.addf %53, %4 : vector<64x64xf32>
    %cst_15 = arith.constant dense<0xFF800000> : vector<64xf32>
    %55 = vector.multi_reduction <maximumf>, %54, %cst_15 [1] : vector<64x64xf32> to vector<64xf32>
    %56 = vector.shape_cast %55 : vector<64xf32> to vector<64x1xf32>
    %57 = vector.broadcast %56 : vector<64x1xf32> to vector<64x64xf32>
    %58 = arith.subf %54, %57 : vector<64x64xf32>
    %59 = math.exp %58 : vector<64x64xf32>
    %cst_16 = arith.constant dense<0.000000e+00> : vector<64xf32>
    %60 = vector.multi_reduction <add>, %59, %cst_16 [1] : vector<64x64xf32> to vector<64xf32>
    %61 = vector.shape_cast %60 : vector<64xf32> to vector<64x1xf32>
    %62 = tpu.reciprocal %61 {approx = true} : vector<64x1xf32> -> vector<64x1xf32>
    %63 = vector.broadcast %62 : vector<64x1xf32> to vector<64x64xf32>
    %64 = arith.mulf %59, %63 : vector<64x64xf32>
    %65 = arith.truncf %49 : vector<8x64xf32> to vector<8x64xbf16>
    %66 = arith.truncf %64 : vector<64x64xf32> to vector<64x64xbf16>
    %cst_17 = arith.constant dense<0.000000e+00> : vector<8x64xf32>
    %67 = tpu.matmul %65, %66, %cst_17 {dimension_numbers = #tpu.dot_dimension_numbers<[1], [1], [0], [0], [0, 0, 1, 0], [], []>} : vector<8x64xbf16>, vector<64x64xbf16>, vector<8x64xf32> -> vector<8x64xf32>
    %68 = vector.extract_strided_slice %3 {offsets = [24, 0], sizes = [8, 64], strides = [1, 1]} : vector<96x64xf32> to vector<8x64xf32>
    %69 = vector.extract_strided_slice %3 {offsets = [56, 0], sizes = [8, 64], strides = [1, 1]} : vector<96x64xf32> to vector<8x64xf32>
    %70 = vector.extract_strided_slice %3 {offsets = [88, 0], sizes = [8, 64], strides = [1, 1]} : vector<96x64xf32> to vector<8x64xf32>
    %71 = tpu.transpose %68, [1, 0] : vector<8x64xf32> -> vector<64x8xf32>
    %72 = arith.truncf %71 : vector<64x8xf32> to vector<64x8xbf16>
    %73 = arith.truncf %69 : vector<8x64xf32> to vector<8x64xbf16>
    %cst_18 = arith.constant dense<0.000000e+00> : vector<64x64xf32>
    %74 = tpu.matmul %72, %73, %cst_18 {dimension_numbers = #tpu.dot_dimension_numbers<[1], [0], [0], [1], [0, 0, 1, 1], [], []>} : vector<64x8xbf16>, vector<8x64xbf16>, vector<64x64xf32> -> vector<64x64xf32>
    %75 = arith.addf %74, %4 : vector<64x64xf32>
    %cst_19 = arith.constant dense<0xFF800000> : vector<64xf32>
    %76 = vector.multi_reduction <maximumf>, %75, %cst_19 [1] : vector<64x64xf32> to vector<64xf32>
    %77 = vector.shape_cast %76 : vector<64xf32> to vector<64x1xf32>
    %78 = vector.broadcast %77 : vector<64x1xf32> to vector<64x64xf32>
    %79 = arith.subf %75, %78 : vector<64x64xf32>
    %80 = math.exp %79 : vector<64x64xf32>
    %cst_20 = arith.constant dense<0.000000e+00> : vector<64xf32>
    %81 = vector.multi_reduction <add>, %80, %cst_20 [1] : vector<64x64xf32> to vector<64xf32>
    %82 = vector.shape_cast %81 : vector<64xf32> to vector<64x1xf32>
    %83 = tpu.reciprocal %82 {approx = true} : vector<64x1xf32> -> vector<64x1xf32>
    %84 = vector.broadcast %83 : vector<64x1xf32> to vector<64x64xf32>
    %85 = arith.mulf %80, %84 : vector<64x64xf32>
    %86 = arith.truncf %70 : vector<8x64xf32> to vector<8x64xbf16>
    %87 = arith.truncf %85 : vector<64x64xf32> to vector<64x64xbf16>
    %cst_21 = arith.constant dense<0.000000e+00> : vector<8x64xf32>
    %88 = tpu.matmul %86, %87, %cst_21 {dimension_numbers = #tpu.dot_dimension_numbers<[1], [1], [0], [0], [0, 0, 1, 0], [], []>} : vector<8x64xbf16>, vector<64x64xbf16>, vector<8x64xf32> -> vector<8x64xf32>
    %89 = tpu.concatenate %25, %46, %67, %88 in 0 : vector<8x64xf32>, vector<8x64xf32>, vector<8x64xf32>, vector<8x64xf32> -> vector<32x64xf32>
    %c0_22 = arith.constant 0 : index
    %c0_23 = arith.constant 0 : index
    %90 = vector.load %arg3[%c0_22, %c0_23] : memref<32x32xbf16, #tpu.memory_space<vmem>>, vector<32x32xbf16>
    %91 = arith.truncf %89 : vector<32x64xf32> to vector<32x64xbf16>
    %cst_24 = arith.constant dense<0.000000e+00> : vector<32x64xf32>
    %92 = tpu.matmul %90, %91, %cst_24 {dimension_numbers = #tpu.dot_dimension_numbers<[1], [0], [0], [1], [0, 0, 1, 1], [], []>} : vector<32x32xbf16>, vector<32x64xbf16>, vector<32x64xf32> -> vector<32x64xf32>
    %c0_25 = arith.constant 0 : index
    %c0_26 = arith.constant 0 : index
    %93 = vector.load %arg4[%c0_25, %c0_26] : memref<32x1xf32, #tpu.memory_space<vmem>>, vector<32x1xf32>
    %94 = vector.broadcast %93 : vector<32x1xf32> to vector<32x64xf32>
    %95 = arith.addf %92, %94 : vector<32x64xf32>
    %c0_27 = arith.constant 0 : index
    %c0_28 = arith.constant 0 : index
    %c0_29 = arith.constant 0 : index
    %96 = vector.load %arg6[%c0_27, %c0_28, %c0_29] : memref<1x32x64xf32, #tpu.memory_space<vmem>>, vector<1x32x64xf32>
    %97 = vector.shape_cast %96 : vector<1x32x64xf32> to vector<32x64xf32>
    %98 = vector.shape_cast %95 : vector<32x64xf32> to vector<1x32x64xf32>
    tpu.vector_store %arg6[%c0_27, %c0_28, %c0_29], %98 {strides = array<i32>} : memref<1x32x64xf32, #tpu.memory_space<vmem>>, vector<1x32x64xf32>,
    return
  }
  func.func @transform_0(%arg0: i32) -> (i32, i32, i32) {
    %c0_i32 = arith.constant 0 : i32
    %c0_i32_0 = arith.constant 0 : i32
    %c0_i32_1 = arith.constant 0 : i32
    return %arg0, %c0_i32, %c0_i32_0 : i32, i32, i32
  }
  func.func @transform_1(%arg0: i32) -> (i32, i32) {
    %c0_i32 = arith.constant 0 : i32
    %c0_i32_0 = arith.constant 0 : i32
    %c0_i32_1 = arith.constant 0 : i32
    return %c0_i32, %c0_i32_0 : i32, i32
  }
  func.func @transform_2(%arg0: i32) -> (i32, i32) {
    %c0_i32 = arith.constant 0 : i32
    %c0_i32_0 = arith.constant 0 : i32
    %c0_i32_1 = arith.constant 0 : i32
    return %c0_i32, %c0_i32_0 : i32, i32
  }
  func.func @transform_3(%arg0: i32) -> (i32, i32) {
    %c0_i32 = arith.constant 0 : i32
    %c0_i32_0 = arith.constant 0 : i32
    %c0_i32_1 = arith.constant 0 : i32
    return %c0_i32, %c0_i32_0 : i32, i32
  }
  func.func @transform_4(%arg0: i32) -> (i32, i32) {
    %c0_i32 = arith.constant 0 : i32
    %c0_i32_0 = arith.constant 0 : i32
    %c0_i32_1 = arith.constant 0 : i32
    return %c0_i32, %c0_i32_0 : i32, i32
  }
  func.func @transform_5(%arg0: i32) -> (i32, i32, i32) {
    %c0_i32 = arith.constant 0 : i32
    %c0_i32_0 = arith.constant 0 : i32
    %c0_i32_1 = arith.constant 0 : i32
    return %arg0, %c0_i32, %c0_i32_0 : i32, i32, i32
  }
}

</mosaic_0001>

<llo_original>
// kernel: tpu_custom_call.1
$region0: #{tpu_custom_call.1}
  #allocation0 [shape = 'u32[]', space=smem, size = 0x4, offset = 0x4, fixed_abs, tag = 'smem constant byte address 0x4 - core index']
  #allocation1 [shape = 'u32[144,128]{1,0:T(1,128)}', space=vmem, size = 0x12000, scoped, tag = 'internal scratch']
  %s0 = inlined_call_operand.vmem [shape: bf16[2,32,64], index: 0, kind: input, shape index: {}]
  %s1 = inlined_call_operand.vmem [shape: bf16[96,32], index: 1, kind: input, shape index: {}]
  %s2 = inlined_call_operand.vmem [shape: bf16[32,32], index: 2, kind: input, shape index: {}]
  %s3 = inlined_call_operand.vmem [shape: f32[32,1], index: 3, kind: input, shape index: {}]
  %s4 = inlined_call_operand.vmem [shape: f32[64,64], index: 4, kind: input, shape index: {}]
  %s5 = inlined_call_operand.hbm [shape: f32[2,32,64], index: 5, kind: output, shape index: {}]
  %s6 = sld [smem:[#allocation0]]
  $region53: #{tpu_custom_call.1} parent=0
    _
  %s8 = ssub.s32 1, %s6
  %s9 = scalar_select 0, %s8, %s6
  $region1: #{tpu_custom_call.1} parent=0
    #allocation2 [shape = 'u8[32768]{0}', space=vmem, size = 0x8000, scoped, tag = 'output window, operand 0']
    #allocation3 [shape = 's32[2]{0}', space=sflag, size = 0x8, scoped, tag = 'scoped memory for tpu_custom_call.1']
    %10 = vsyncpa [#allocation3], 0
    %s11 = scalar_lea.sflag [#allocation3], 1
    %12 = vsyncpa %s11, 0
    loop: start=0, step=1, limit=4
    $region2: #{tpu_custom_call.1} parent=1 // loop_pre_header
      _
    $region3: #{tpu_custom_call.1} parent=1 // loop_header
      %s14 = sphi 0, %s18
      %p15 = scmp.ge.s32.totalorder %s14, 4
      %s24 = sphi 0, %s26
      %s27 = sphi 0, %s24
      %s28 = sphi 0, %s27
      %s44 = sphi 0, %s28
      %s48 = sphi 0, %s48
      %s50 = sphi 0, %s48
      %s51 = sphi 0, %s50
      %s65 = sphi 0, %s51
      %s69 = sphi 0, %s69
      %s71 = sphi 0, %s69
      %s72 = sphi 0, %s71
      %s86 = sphi 0, %s72
      %s90 = sphi 0, %s90
      %s92 = sphi 0, %s90
      %s93 = sphi 0, %s92
      %s107 = sphi 0, %s93
      %s111 = sphi 0, %s111
      %s113 = sphi 0, %s111
      %s114 = sphi 0, %s113
      %s128 = sphi 0, %s114
      %s134 = sphi 0, %s136
      %s137 = sphi 0, %s134
      %s138 = sphi 0, %s137
      %s154 = sphi 0, %s138
    $region4: #{tpu_custom_call.1} parent=1 // loop_header_branch
      %17 = sbr.rel (%p15) target = $region8
    $region5: #{tpu_custom_call.1} parent=1 // loop_body
      %s19 = ssub.s32 %s14, 1
      %s20 = ssub.s32 %s14, 2
      %s21 = sadd.s32 %s14, 1
      %s22 = ssub.s32 %s14, %s21
      %p23 = scmp.eq.s32.totalorder %s22, 0
      %s25 = sadd.s32 %s24, 1
      %s26 = scalar_select %p23, %s24, %s25
      %p29 = pneg %p23
      %p30 = scmp.eq.s32.totalorder %s14, 1
      %p31 = por %p29, %p30
      %p32 = scmp.ne.s32.totalorder %s24, %s27
      %p33 = scmp.eq.s32.totalorder %s14, 0
      %p34 = por %p32, %p33
      %p35 = scmp.ne.s32.totalorder %s24, %s27
      %p36 = scmp.eq.s32.totalorder %s19, 1
      %p37 = por %p35, %p36
      %p38 = scmp.ne.s32.totalorder %s27, %s28
      %p39 = scmp.eq.s32.totalorder %s19, 0
      %p40 = por %p38, %p39
      %p41 = scmp.ne.s32.totalorder %s27, %s28
      %p42 = scmp.eq.s32.totalorder %s20, 1
      %p43 = por %p41, %p42
      %p45 = scmp.ne.s32.totalorder %s28, %s44
      %p46 = scmp.eq.s32.totalorder %s20, 0
      %p47 = por %p45, %p46
      %s49 = sadd.s32 %s48, 1
      %p52 = scmp.eq.s32.totalorder %s14, 1
      %p53 = scmp.ne.s32.totalorder %s48, %s50
      %p54 = scmp.eq.s32.totalorder %s14, 0
      %p55 = por %p53, %p54
      %p56 = scmp.ne.s32.totalorder %s48, %s50
      %p57 = scmp.eq.s32.totalorder %s19, 1
      %p58 = por %p56, %p57
      %p59 = scmp.ne.s32.totalorder %s50, %s51
      %p60 = scmp.eq.s32.totalorder %s19, 0
      %p61 = por %p59, %p60
      %p62 = scmp.ne.s32.totalorder %s50, %s51
      %p63 = scmp.eq.s32.totalorder %s20, 1
      %p64 = por %p62, %p63
      %p66 = scmp.ne.s32.totalorder %s51, %s65
      %p67 = scmp.eq.s32.totalorder %s20, 0
      %p68 = por %p66, %p67
      %s70 = sadd.s32 %s69, 1
      %p73 = scmp.eq.s32.totalorder %s14, 1
      %p74 = scmp.ne.s32.totalorder %s69, %s71
      %p75 = scmp.eq.s32.totalorder %s14, 0
      %p76 = por %p74, %p75
      %p77 = scmp.ne.s32.totalorder %s69, %s71
      %p78 = scmp.eq.s32.totalorder %s19, 1
      %p79 = por %p77, %p78
      %p80 = scmp.ne.s32.totalorder %s71, %s72
      %p81 = scmp.eq.s32.totalorder %s19, 0
      %p82 = por %p80, %p81
      %p83 = scmp.ne.s32.totalorder %s71, %s72
      %p84 = scmp.eq.s32.totalorder %s20, 1
      %p85 = por %p83, %p84
      %p87 = scmp.ne.s32.totalorder %s72, %s86
      %p88 = scmp.eq.s32.totalorder %s20, 0
      %p89 = por %p87, %p88
      %s91 = sadd.s32 %s90, 1
      %p94 = scmp.eq.s32.totalorder %s14, 1
      %p95 = scmp.ne.s32.totalorder %s90, %s92
      %p96 = scmp.eq.s32.totalorder %s14, 0
      %p97 = por %p95, %p96
      %p98 = scmp.ne.s32.totalorder %s90, %s92
      %p99 = scmp.eq.s32.totalorder %s19, 1
      %p100 = por %p98, %p99
      %p101 = scmp.ne.s32.totalorder %s92, %s93
      %p102 = scmp.eq.s32.totalorder %s19, 0
      %p103 = por %p101, %p102
      %p104 = scmp.ne.s32.totalorder %s92, %s93
      %p105 = scmp.eq.s32.totalorder %s20, 1
      %p106 = por %p104, %p105
      %p108 = scmp.ne.s32.totalorder %s93, %s107
      %p109 = scmp.eq.s32.totalorder %s20, 0
      %p110 = por %p108, %p109
      %s112 = sadd.s32 %s111, 1
      %p115 = scmp.eq.s32.totalorder %s14, 1
      %p116 = scmp.ne.s32.totalorder %s111, %s113
      %p117 = scmp.eq.s32.totalorder %s14, 0
      %p118 = por %p116, %p117
      %p119 = scmp.ne.s32.totalorder %s111, %s113
      %p120 = scmp.eq.s32.totalorder %s19, 1
      %p121 = por %p119, %p120
      %p122 = scmp.ne.s32.totalorder %s113, %s114
      %p123 = scmp.eq.s32.totalorder %s19, 0
      %p124 = por %p122, %p123
      %p125 = scmp.ne.s32.totalorder %s113, %s114
      %p126 = scmp.eq.s32.totalorder %s20, 1
      %p127 = por %p125, %p126
      %p129 = scmp.ne.s32.totalorder %s114, %s128
      %p130 = scmp.eq.s32.totalorder %s20, 0
      %p131 = por %p129, %p130
      %s132 = ssub.s32 %s14, %s21
      %p133 = scmp.eq.s32.totalorder %s132, 0
      %s135 = sadd.s32 %s134, 1
      %s136 = scalar_select %p133, %s134, %s135
      %p139 = pneg %p133
      %p140 = scmp.eq.s32.totalorder %s14, 1
      %p141 = por %p139, %p140
      %p142 = scmp.ne.s32.totalorder %s134, %s137
      %p143 = scmp.eq.s32.totalorder %s14, 0
      %p144 = por %p142, %p143
      %p145 = scmp.ne.s32.totalorder %s134, %s137
      %p146 = scmp.eq.s32.totalorder %s19, 1
      %p147 = por %p145, %p146
      %p148 = scmp.ne.s32.totalorder %s137, %s138
      %p149 = scmp.eq.s32.totalorder %s19, 0
      %p150 = por %p148, %p149
      %p151 = scmp.ne.s32.totalorder %s137, %s138
      %p152 = scmp.eq.s32.totalorder %s20, 1
      %p153 = por %p151, %p152
      %p155 = scmp.ne.s32.totalorder %s138, %s154
      %p156 = scmp.eq.s32.totalorder %s20, 0
      %p157 = por %p155, %p156
      %p158 = scmp.le.s32.totalorder 1, %s14
      %p159 = scmp.lt.s32.totalorder %s14, 3
      %p160 = pnand %p158, %p159
      %p161 = pneg %p160
      // Predicated region
      $region9: #{tpu_custom_call.1} parent=5 // pred_check
        _
      $region10: #{tpu_custom_call.1} parent=5 // pred_check_branch
        %163 = sbr.rel (%p160) target = $region12
      $region11: #{tpu_custom_call.1} parent=5 // pred_region
        %s164 = ssub.s32 %s14, 1
        // Predicated region
        $region13: #{tpu_custom_call.1} parent=11 // pred_check
          %p165 = pneg %p61
        $region14: #{tpu_custom_call.1} parent=11 // pred_check_branch
          %167 = sbr.rel (%p165) target = $region16
        $region15: #{tpu_custom_call.1} parent=11 // pred_region
          _
        $region16: #{tpu_custom_call.1} parent=11 // pred_fallthru
          _
        // Predicated region
        $region17: #{tpu_custom_call.1} parent=11 // pred_check
          %p168 = pneg %p82
        $region18: #{tpu_custom_call.1} parent=11 // pred_check_branch
          %170 = sbr.rel (%p168) target = $region20
        $region19: #{tpu_custom_call.1} parent=11 // pred_region
          _
        $region20: #{tpu_custom_call.1} parent=11 // pred_fallthru
          _
        // Predicated region
        $region21: #{tpu_custom_call.1} parent=11 // pred_check
          %p171 = pneg %p103
        $region22: #{tpu_custom_call.1} parent=11 // pred_check_branch
          %173 = sbr.rel (%p171) target = $region24
        $region23: #{tpu_custom_call.1} parent=11 // pred_region
          _
        $region24: #{tpu_custom_call.1} parent=11 // pred_fallthru
          _
        // Predicated region
        $region25: #{tpu_custom_call.1} parent=11 // pred_check
          %p174 = pneg %p124
        $region26: #{tpu_custom_call.1} parent=11 // pred_check_branch
          %176 = sbr.rel (%p174) target = $region28
        $region27: #{tpu_custom_call.1} parent=11 // pred_region
          _
        $region28: #{tpu_custom_call.1} parent=11 // pred_fallthru
          _
      $region12: #{tpu_custom_call.1} parent=5 // pred_fallthru
        _
      %p177 = scmp.lt.s32.totalorder %s14, 2
      // Predicated region
      $region29: #{tpu_custom_call.1} parent=5 // pred_check
        %p178 = pneg %p177
      $region30: #{tpu_custom_call.1} parent=5 // pred_check_branch
        %180 = sbr.rel (%p178) target = $region32
      $region31: #{tpu_custom_call.1} parent=5 // pred_region
        // Predicated region
        $region33: #{tpu_custom_call.1} parent=31 // pred_check
          %p181 = pneg %p34
        $region34: #{tpu_custom_call.1} parent=31 // pred_check_branch
          %183 = sbr.rel (%p181) target = $region36
        $region35: #{tpu_custom_call.1} parent=31 // pred_region
          %p184 = scmp.lt.s32.totalorder %s14, 1
          %s185 = scalar_select %p184, %s14, 1
          %s186 = smul.addr %s185, 4
          %s187 = smul.addr %s186, 4
          %s188 = scalar_lea.vmem %s0, %s187
        $region36: #{tpu_custom_call.1} parent=31 // pred_fallthru
          _
      $region32: #{tpu_custom_call.1} parent=5 // pred_fallthru
        _
      %p189 = scmp.le.s32.totalorder 1, %s14
      %p190 = scmp.lt.s32.totalorder %s14, 3
      %p191 = pnand %p189, %p190
      %p192 = pneg %p191
      // Predicated region
      $region37: #{tpu_custom_call.1} parent=5 // pred_check
        _
      $region38: #{tpu_custom_call.1} parent=5 // pred_check_branch
        %194 = sbr.rel (%p191) target = $region40
      $region39: #{tpu_custom_call.1} parent=5 // pred_region
        %s195 = ssub.s32 %s14, 1
        %p196 = scmp.lt.s32.totalorder %s19, 1
        %s197 = scalar_select %p196, %s19, 1
        %s198 = smul.addr %s197, 4
        %s199 = smul.addr %s198, 4
        %s200 = scalar_lea.vmem %s0, %s199
        %p201 = pneg %p40
        %p202 = pneg %p37
        %p203 = pneg %p61
        %p204 = pneg %p58
        %p205 = pneg %p82
        %p206 = pneg %p79
        %p207 = pneg %p103
        %p208 = pneg %p100
        %p209 = pneg %p124
        %p210 = pneg %p121
        %p211 = pneg %p150
        %p212 = pneg %p147
        %s213 = sand.u32 %s137, 1
        %s214 = scalar_lea.sflag [#allocation3], %s213
        %s215 = sand.u32 %s137, 1
        %s216 = smul.addr %s215, 32
        %s217 = scalar_lea.vmem [#allocation2], %s216
        %p218 = scmp.lt.s32.totalorder %s19, 1
        %s219 = scalar_select %p218, %s19, 1
        %s220 = smul.addr %s219, 4
        %s221 = smul.addr %s220, 4
        %s222 = scalar_lea.vmem %s0, %s221
        %v224 = vld [vmem:[%s1] sm:$0xf]
        %v225 = vld [vmem:[%s1 + $0x4] sm:$0xf]
        %v226 = vld [vmem:[%s1 + $0x8] sm:$0xf]
        %v227 = vld [vmem:[%s1 + $0xc] sm:$0xf]
        %v228 = vld [vmem:[%s1 + $0x10] sm:$0xf]
        %v229 = vld [vmem:[%s1 + $0x14] sm:$0xf]
        %v230 = vld [vmem:[%s1 + $0x18] sm:$0xf]
        %v231 = vld [vmem:[%s1 + $0x1c] sm:$0xf]
        %v232 = vld [vmem:[%s1 + $0x20] sm:$0xf]
        %v233 = vld [vmem:[%s1 + $0x24] sm:$0xf]
        %v234 = vld [vmem:[%s1 + $0x28] sm:$0xf]
        %v235 = vld [vmem:[%s1 + $0x2c] sm:$0xf]
        %v236 = vld [vmem:[%s222] sm:$0xf]
        %v237 = vld [vmem:[%s222 + $0x4] sm:$0xf]
        %v238 = vld [vmem:[%s222 + $0x8] sm:$0xf]
        %v239 = vld [vmem:[%s222 + $0xc] sm:$0xf]
        %v252 = vunpack.c.l.b16 %v224
        %v253 = vunpack.c.l.b16 %v225
        %v254 = vunpack.c.l.b16 %v226
        %v255 = vunpack.c.l.b16 %v227
        %v256 = vunpack.c.l.b16 %v228
        %v257 = vunpack.c.l.b16 %v229
        %v258 = vunpack.c.l.b16 %v230
        %v259 = vunpack.c.l.b16 %v231
        %v260 = vunpack.c.l.b16 %v232
        %v261 = vunpack.c.l.b16 %v233
        %v262 = vunpack.c.l.b16 %v234
        %v263 = vunpack.c.l.b16 %v235
        %v264 = vpack.c.b16 %v253, %v252
        %v265 = vpack.c.b16 %v255, %v254
        %v266 = vpack.c.b16 %v257, %v256
        %v267 = vpack.c.b16 %v259, %v258
        %v268 = vpack.c.b16 %v261, %v260
        %v269 = vpack.c.b16 %v263, %v262
        %v274 = vunpack.c.l.b16 %v236
        %v275 = vunpack.c.l.b16 %v237
        %v276 = vunpack.c.l.b16 %v238
        %v277 = vunpack.c.l.b16 %v239
        %v278 = vpack.c.b16 %v275, %v274
        %v279 = vpack.c.b16 %v277, %v276
        %vm282 = vcmask 261120
        %v284 = vsel %vm282, %v264, 0
        %v287 = vsel %vm282, %v265, 0
        %v290 = vsel %vm282, %v266, 0
        %v293 = vsel %vm282, %v267, 0
        %v296 = vsel %vm282, %v268, 0
        %v299 = vsel %vm282, %v269, 0
        %301 = vmatprep.subr.bf16.mxu0 0
        %302 = vmatpush1.bf16.msra.mxu0 %v278
        %303 = vmatprep.subr.bf16.mxu0 0
        %304 = vmatpush1.bf16.msra.mxu0 %v279
        %305 = vmatprep.subr.bf16.mxu0 0
        %306 = vmatpush1.bf16.msra.mxu0 0
        %307 = vmatprep.subr.bf16.mxu0 0
        %308 = vmatpush1.bf16.msra.mxu0 0
        %309 = vmatprep.subr.bf16.mxu0 0
        %310 = vmatpush1.bf16.msra.mxu0 0
        %311 = vmatprep.subr.bf16.mxu0 0
        %312 = vmatpush1.bf16.msra.mxu0 0
        %313 = vmatprep.subr.bf16.mxu0 0
        %314 = vmatpush1.bf16.msra.mxu0 0
        %315 = vmatprep.subr.bf16.mxu0 0
        %316 = vmatpush1.bf16.msra.mxu0 0
        %317 = vmatprep.subr.bf16.mxu0 0
        %318 = vmatpush1.bf16.msra.mxu0 0
        %319 = vmatprep.subr.bf16.mxu0 0
        %320 = vmatpush1.bf16.msra.mxu0 0
        %321 = vmatprep.subr.bf16.mxu0 0
        %322 = vmatpush1.bf16.msra.mxu0 0
        %323 = vmatprep.subr.bf16.mxu0 0
        %324 = vmatpush1.bf16.msra.mxu0 0
        %325 = vmatprep.subr.bf16.mxu0 0
        %326 = vmatpush1.bf16.msra.mxu0 0
        %327 = vmatprep.subr.bf16.mxu0 0
        %328 = vmatpush1.bf16.msra.mxu0 0
        %329 = vmatprep.subr.bf16.mxu0 0
        %330 = vmatpush1.bf16.msra.mxu0 0
        %331 = vmatprep.subr.bf16.mxu0 0
        %332 = vmatpush1.bf16.msra.mxu0 0
        %333 = vmatprep.mubr.bf16.mxu0 0
        %334 = vmatmul.mubr.bf16.gmra.mrb[0].mxu0 %v284
        %v335 = vpop.f32.mrb[0].mxu0
        %v336 = vadd.f32 0.0, %v335
        %v337 = vpop.f32.mrb[0].mxu0
        %v338 = vpop.f32.mrb[0].mxu0
        %v339 = vadd.f32 0.0, %v338
        %v340 = vpop.f32.mrb[0].mxu0
        %341 = vmatprep.mubr.bf16.mxu0 0
        %342 = vmatmul.mubr.bf16.gmra.mrb[0].mxu0 %v287
        %v343 = vpop.f32.mrb[0].mxu0
        %v344 = vadd.f32 0.0, %v343
        %v345 = vpop.f32.mrb[0].mxu0
        %v346 = vpop.f32.mrb[0].mxu0
        %v347 = vadd.f32 0.0, %v346
        %v348 = vpop.f32.mrb[0].mxu0
        %349 = vmatprep.mubr.bf16.mxu0 0
        %350 = vmatmul.mubr.bf16.gmra.mrb[0].mxu0 %v290
        %v351 = vpop.f32.mrb[0].mxu0
        %v352 = vadd.f32 0.0, %v351
        %v353 = vpop.f32.mrb[0].mxu0
        %v354 = vpop.f32.mrb[0].mxu0
        %v355 = vadd.f32 0.0, %v354
        %v356 = vpop.f32.mrb[0].mxu0
        %357 = vmatprep.mubr.bf16.mxu0 0
        %358 = vmatmul.mubr.bf16.gmra.mrb[0].mxu0 %v293
        %v359 = vpop.f32.mrb[0].mxu0
        %v360 = vadd.f32 0.0, %v359
        %v361 = vpop.f32.mrb[0].mxu0
        %v362 = vpop.f32.mrb[0].mxu0
        %v363 = vadd.f32 0.0, %v362
        %v364 = vpop.f32.mrb[0].mxu0
        %365 = vmatprep.mubr.bf16.mxu0 0
        %366 = vmatmul.mubr.bf16.gmra.mrb[0].mxu0 %v296
        %v367 = vpop.f32.mrb[0].mxu0
        %v368 = vadd.f32 0.0, %v367
        %v369 = vpop.f32.mrb[0].mxu0
        %v370 = vpop.f32.mrb[0].mxu0
        %v371 = vadd.f32 0.0, %v370
        %v372 = vpop.f32.mrb[0].mxu0
        %373 = vmatprep.mubr.bf16.mxu0 0
        %374 = vmatmul.mubr.bf16.gmra.mrb[0].mxu0 %v299
        %v375 = vpop.f32.mrb[0].mxu0
        %v376 = vadd.f32 0.0, %v375
        %v377 = vpop.f32.mrb[0].mxu0
        %v378 = vpop.f32.mrb[0].mxu0
        %v379 = vadd.f32 0.0, %v378
        %v380 = vpop.f32.mrb[0].mxu0
        %381 = vdwg.mxu0
        %v382 = vld [vmem:[%s4] sm:$0xff]
        %v383 = vld [vmem:[%s4 + $0x8] sm:$0xff]
        %v384 = vld [vmem:[%s4 + $0x10] sm:$0xff]
        %v385 = vld [vmem:[%s4 + $0x18] sm:$0xff]
        %v386 = vld [vmem:[%s4 + $0x20] sm:$0xff]
        %v387 = vld [vmem:[%s4 + $0x28] sm:$0xff]
        %v388 = vld [vmem:[%s4 + $0x30] sm:$0xff]
        %v389 = vld [vmem:[%s4 + $0x38] sm:$0xff]
        %390 = vxpose.xlu0.b32.start [1/16] %v336, 128
        %391 = vxpose.xlu0.b32.cont [2/16] 0.0, 128
        %392 = vxpose.xlu0.b32.cont [3/16] 0.0, 128
        %393 = vxpose.xlu0.b32.cont [4/16] 0.0, 128
        %394 = vxpose.xlu0.b32.cont [5/16] 0.0, 128
        %395 = vxpose.xlu0.b32.cont [6/16] 0.0, 128
        %396 = vxpose.xlu0.b32.cont [7/16] 0.0, 128
        %397 = vxpose.xlu0.b32.cont [8/16] 0.0, 128
        %398 = vxpose.xlu0.b32.cont [9/16] 0.0, 128
        %399 = vxpose.xlu0.b32.cont [10/16] 0.0, 128
        %400 = vxpose.xlu0.b32.cont [11/16] 0.0, 128
        %401 = vxpose.xlu0.b32.cont [12/16] 0.0, 128
        %402 = vxpose.xlu0.b32.cont [13/16] 0.0, 128
        %403 = vxpose.xlu0.b32.cont [14/16] 0.0, 128
        %404 = vxpose.xlu0.b32.cont [15/16] 0.0, 128
        %405 = vxpose.xlu0.b32.end [16/16] 0.0, 128
        %v406 = vpop.trf.xlu0
        %v407 = vpop.trf.xlu0
        %v408 = vpop.trf.xlu0
        %v409 = vpop.trf.xlu0
        %v410 = vpop.trf.xlu0
        %v411 = vpop.trf.xlu0
        %v412 = vpop.trf.xlu0
        %v413 = vpop.trf.xlu0
        %v414 = vpop.trf.xlu0
        %v415 = vpop.trf.xlu0
        %v416 = vpop.trf.xlu0
        %v417 = vpop.trf.xlu0
        %v418 = vpop.trf.xlu0
        %v419 = vpop.trf.xlu0
        %v420 = vpop.trf.xlu0
        %v421 = vpop.trf.xlu0
        %v422 = vpack.c.bf16 %v407, %v406
        %v423 = vpack.c.bf16 %v409, %v408
        %v424 = vpack.c.bf16 %v411, %v410
        %v425 = vpack.c.bf16 %v413, %v412
        %v426 = vpack.c.bf16 %v352, %v352
        %vm427 = vcmask 64512
        %v429 = vsel %vm427, %v422, 0
        %v432 = vsel %vm427, %v423, 0
        %v435 = vsel %vm427, %v424, 0
        %v438 = vsel %vm427, %v425, 0
        %vm440 = vcmask 1043456
        %v442 = vsel %vm440, %v426, 0
        %444 = vmatprep.subr.bf16.mxu0 0
        %445 = vmatpush1.bf16.msra.mxu0 %v442
        %446 = vmatprep.subr.bf16.mxu0 0
        %447 = vmatpush1.bf16.msra.mxu0 0
        %448 = vmatprep.subr.bf16.mxu0 0
        %449 = vmatpush1.bf16.msra.mxu0 0
        %450 = vmatprep.subr.bf16.mxu0 0
        %451 = vmatpush1.bf16.msra.mxu0 0
        %452 = vmatprep.subr.bf16.mxu0 0
        %453 = vmatpush1.bf16.msra.mxu0 0
        %454 = vmatprep.subr.bf16.mxu0 0
        %455 = vmatpush1.bf16.msra.mxu0 0
        %456 = vmatprep.subr.bf16.mxu0 0
        %457 = vmatpush1.bf16.msra.mxu0 0
        %458 = vmatprep.subr.bf16.mxu0 0
        %459 = vmatpush1.bf16.msra.mxu0 0
        %460 = vmatprep.subr.bf16.mxu0 0
        %461 = vmatpush1.bf16.msra.mxu0 0
        %462 = vmatprep.subr.bf16.mxu0 0
        %463 = vmatpush1.bf16.msra.mxu0 0
        %464 = vmatprep.subr.bf16.mxu0 0
        %465 = vmatpush1.bf16.msra.mxu0 0
        %466 = vmatprep.subr.bf16.mxu0 0
        %467 = vmatpush1.bf16.msra.mxu0 0
        %468 = vmatprep.subr.bf16.mxu0 0
        %469 = vmatpush1.bf16.msra.mxu0 0
        %470 = vmatprep.subr.bf16.mxu0 0
        %471 = vmatpush1.bf16.msra.mxu0 0
        %472 = vmatprep.subr.bf16.mxu0 0
        %473 = vmatpush1.bf16.msra.mxu0 0
        %474 = vmatprep.subr.bf16.mxu0 0
        %475 = vmatpush1.bf16.msra.mxu0 0
        %476 = vmatprep.mubr.bf16.mxu0 0
        %477 = vmatmul.mubr.bf16.gmra.mrb[0].mxu0 %v429
        %v478 = vpop.f32.mrb[0].mxu0
        %v479 = vadd.f32 %v382, %v478
        %v480 = vpop.f32.mrb[0].mxu0
        %v481 = vpop.f32.mrb[0].mxu0
        %v482 = vadd.f32 %v383, %v481
        %v483 = vpop.f32.mrb[0].mxu0
        %484 = vmatprep.mubr.bf16.mxu0 0
        %485 = vmatmul.mubr.bf16.gmra.mrb[0].mxu0 %v432
        %v486 = vpop.f32.mrb[0].mxu0
        %v487 = vadd.f32 %v384, %v486
        %v488 = vpop.f32.mrb[0].mxu0
        %v489 = vpop.f32.mrb[0].mxu0
        %v490 = vadd.f32 %v385, %v489
        %v491 = vpop.f32.mrb[0].mxu0
        %492 = vmatprep.mubr.bf16.mxu0 0
        %493 = vmatmul.mubr.bf16.gmra.mrb[0].mxu0 %v435
        %v494 = vpop.f32.mrb[0].mxu0
        %v495 = vadd.f32 %v386, %v494
        %v496 = vpop.f32.mrb[0].mxu0
        %v497 = vpop.f32.mrb[0].mxu0
        %v498 = vadd.f32 %v387, %v497
        %v499 = vpop.f32.mrb[0].mxu0
        %500 = vmatprep.mubr.bf16.mxu0 0
        %501 = vmatmul.mubr.bf16.gmra.mrb[0].mxu0 %v438
        %v502 = vpop.f32.mrb[0].mxu0
        %v503 = vadd.f32 %v388, %v502
        %v504 = vpop.f32.mrb[0].mxu0
        %v505 = vpop.f32.mrb[0].mxu0
        %v506 = vadd.f32 %v389, %v505
        %v507 = vpop.f32.mrb[0].mxu0
        %508 = vdwg.mxu0
        %vm509 = vcmask 523264
        %v510 = vsel %vm509, %v479, -inf
        %511 = vmax.xlane.f32.xlu0 %v510
        %v512 = vpop.xlane.xlu0 %511
        %v513 = vsel %vm509, %v482, -inf
        %514 = vmax.xlane.f32.xlu0 %v513
        %v515 = vpop.xlane.xlu0 %514
        %v516 = vsel %vm509, %v487, -inf
        %517 = vmax.xlane.f32.xlu0 %v516
        %v518 = vpop.xlane.xlu0 %517
        %v519 = vsel %vm509, %v490, -inf
        %520 = vmax.xlane.f32.xlu0 %v519
        %v521 = vpop.xlane.xlu0 %520
        %v522 = vsel %vm509, %v495, -inf
        %523 = vmax.xlane.f32.xlu0 %v522
        %v524 = vpop.xlane.xlu0 %523
        %v525 = vsel %vm509, %v498, -inf
        %526 = vmax.xlane.f32.xlu0 %v525
        %v527 = vpop.xlane.xlu0 %526
        %v528 = vsel %vm509, %v503, -inf
        %529 = vmax.xlane.f32.xlu0 %v528
        %v530 = vpop.xlane.xlu0 %529
        %v531 = vsel %vm509, %v506, -inf
        %532 = vmax.xlane.f32.xlu0 %v531
        %v533 = vpop.xlane.xlu0 %532
        %v534 = vsub.f32 %v479, %v512
        %v535 = vsub.f32 %v482, %v515
        %v536 = vsub.f32 %v487, %v518
        %v537 = vsub.f32 %v490, %v521
        %v538 = vsub.f32 %v495, %v524
        %v539 = vsub.f32 %v498, %v527
        %v540 = vsub.f32 %v503, %v530
        %v541 = vsub.f32 %v506, %v533
        %v542 = vmul.f32 %v534, 1.442695
        %v543 = vpow.pop %v542
        %v544 = vmul.f32 %v535, 1.442695
        %v545 = vpow.pop %v544
        %v546 = vmul.f32 %v536, 1.442695
        %v547 = vpow.pop %v546
        %v548 = vmul.f32 %v537, 1.442695
        %v549 = vpow.pop %v548
        %v550 = vmul.f32 %v538, 1.442695
        %v551 = vpow.pop %v550
        %v552 = vmul.f32 %v539, 1.442695
        %v553 = vpow.pop %v552
        %v554 = vmul.f32 %v540, 1.442695
        %v555 = vpow.pop %v554
        %v556 = vmul.f32 %v541, 1.442695
        %v557 = vpow.pop %v556
        %v558 = vsel %vm509, %v543, 0.0
        %559 = vadd.xlane.f32.xlu0 %v558
        %v560 = vpop.xlane.xlu0 %559
        %v561 = vsel %vm509, %v545, 0.0
        %562 = vadd.xlane.f32.xlu0 %v561
        %v563 = vpop.xlane.xlu0 %562
        %v564 = vsel %vm509, %v547, 0.0
        %565 = vadd.xlane.f32.xlu0 %v564
        %v566 = vpop.xlane.xlu0 %565
        %v567 = vsel %vm509, %v549, 0.0
        %568 = vadd.xlane.f32.xlu0 %v567
        %v569 = vpop.xlane.xlu0 %568
        %v570 = vsel %vm509, %v551, 0.0
        %571 = vadd.xlane.f32.xlu0 %v570
        %v572 = vpop.xlane.xlu0 %571
        %v573 = vsel %vm509, %v553, 0.0
        %574 = vadd.xlane.f32.xlu0 %v573
        %v575 = vpop.xlane.xlu0 %574
        %v576 = vsel %vm509, %v555, 0.0
        %577 = vadd.xlane.f32.xlu0 %v576
        %v578 = vpop.xlane.xlu0 %577
        %v579 = vsel %vm509, %v557, 0.0
        %580 = vadd.xlane.f32.xlu0 %v579
        %v581 = vpop.xlane.xlu0 %580
        %v582 = vrcp.pop %v560
        %v583 = vrcp.pop %v563
        %v584 = vrcp.pop %v566
        %v585 = vrcp.pop %v569
        %v586 = vrcp.pop %v572
        %v587 = vrcp.pop %v575
        %v588 = vrcp.pop %v578
        %v589 = vrcp.pop %v581
        %v590 = vmul.f32 %v543, %v582
        %v591 = vmul.f32 %v545, %v583
        %v592 = vmul.f32 %v547, %v584
        %v593 = vmul.f32 %v549, %v585
        %v594 = vmul.f32 %v551, %v586
        %v595 = vmul.f32 %v553, %v587
        %v596 = vmul.f32 %v555, %v588
        %v597 = vmul.f32 %v557, %v589
        %v598 = vpack.c.bf16 %v368, %v368
        %v599 = vpack.c.bf16 %v591, %v590
        %v600 = vpack.c.bf16 %v593, %v592
        %v601 = vpack.c.bf16 %v595, %v594
        %v602 = vpack.c.bf16 %v597, %v596
        %v604 = vsel %vm509, %v598, 0
        %v607 = vsel %vm509, %v599, 0
        %v610 = vsel %vm509, %v600, 0
        %v613 = vsel %vm509, %v601, 0
        %v616 = vsel %vm509, %v602, 0
        %618 = vmatprep.subr.bf16.mxu0 0
        %619 = vmatpush1.bf16.xpose.msra.mxu0 %v607
        %620 = vmatprep.subr.bf16.mxu0 0
        %621 = vmatpush1.bf16.xpose.msra.mxu0 %v610
        %622 = vmatprep.subr.bf16.mxu0 0
        %623 = vmatpush1.bf16.xpose.msra.mxu0 %v613
        %624 = vmatprep.subr.bf16.mxu0 0
        %625 = vmatpush1.bf16.xpose.msra.mxu0 %v616
        %626 = vmatprep.subr.bf16.mxu0 0
        %627 = vmatpush1.bf16.xpose.msra.mxu0 0
        %628 = vmatprep.subr.bf16.mxu0 0
        %629 = vmatpush1.bf16.xpose.msra.mxu0 0
        %630 = vmatprep.subr.bf16.mxu0 0
        %631 = vmatpush1.bf16.xpose.msra.mxu0 0
        %632 = vmatprep.subr.bf16.mxu0 0
        %633 = vmatpush1.bf16.xpose.msra.mxu0 0
        %634 = vmatprep.subr.bf16.mxu0 0
        %635 = vmatpush1.bf16.xpose.msra.mxu0 0
        %636 = vmatprep.subr.bf16.mxu0 0
        %637 = vmatpush1.bf16.xpose.msra.mxu0 0
        %638 = vmatprep.subr.bf16.mxu0 0
        %639 = vmatpush1.bf16.xpose.msra.mxu0 0
        %640 = vmatprep.subr.bf16.mxu0 0
        %641 = vmatpush1.bf16.xpose.msra.mxu0 0
        %642 = vmatprep.subr.bf16.mxu0 0
        %643 = vmatpush1.bf16.xpose.msra.mxu0 0
        %644 = vmatprep.subr.bf16.mxu0 0
        %645 = vmatpush1.bf16.xpose.msra.mxu0 0
        %646 = vmatprep.subr.bf16.mxu0 0
        %647 = vmatpush1.bf16.xpose.msra.mxu0 0
        %648 = vmatprep.subr.bf16.mxu0 0
        %649 = vmatpush1.bf16.xpose.msra.mxu0 0
        %650 = vmatprep.mubr.bf16.mxu0 0
        %651 = vmatmul.mubr.bf16.gmra.mrb[0].mxu0 %v604
        %v652 = vpop.f32.mrb[0].mxu0
        %v653 = vadd.f32 0.0, %v652
        %v654 = vpop.f32.mrb[0].mxu0
        %v655 = vpop.f32.mrb[0].mxu0
        %v656 = vpop.f32.mrb[0].mxu0
        %657 = vdwg.mxu0
        %658 = vxpose.xlu0.b32.start [1/16] %v339, 128
        %659 = vxpose.xlu0.b32.cont [2/16] 0.0, 128
        %660 = vxpose.xlu0.b32.cont [3/16] 0.0, 128
        %661 = vxpose.xlu0.b32.cont [4/16] 0.0, 128
        %662 = vxpose.xlu0.b32.cont [5/16] 0.0, 128
        %663 = vxpose.xlu0.b32.cont [6/16] 0.0, 128
        %664 = vxpose.xlu0.b32.cont [7/16] 0.0, 128
        %665 = vxpose.xlu0.b32.cont [8/16] 0.0, 128
        %666 = vxpose.xlu0.b32.cont [9/16] 0.0, 128
        %667 = vxpose.xlu0.b32.cont [10/16] 0.0, 128
        %668 = vxpose.xlu0.b32.cont [11/16] 0.0, 128
        %669 = vxpose.xlu0.b32.cont [12/16] 0.0, 128
        %670 = vxpose.xlu0.b32.cont [13/16] 0.0, 128
        %671 = vxpose.xlu0.b32.cont [14/16] 0.0, 128
        %672 = vxpose.xlu0.b32.cont [15/16] 0.0, 128
        %673 = vxpose.xlu0.b32.end [16/16] 0.0, 128
        %v674 = vpop.trf.xlu0
        %v675 = vpop.trf.xlu0
        %v676 = vpop.trf.xlu0
        %v677 = vpop.trf.xlu0
        %v678 = vpop.trf.xlu0
        %v679 = vpop.trf.xlu0
        %v680 = vpop.trf.xlu0
        %v681 = vpop.trf.xlu0
        %v682 = vpop.trf.xlu0
        %v683 = vpop.trf.xlu0
        %v684 = vpop.trf.xlu0
        %v685 = vpop.trf.xlu0
        %v686 = vpop.trf.xlu0
        %v687 = vpop.trf.xlu0
        %v688 = vpop.trf.xlu0
        %v689 = vpop.trf.xlu0
        %v690 = vpack.c.bf16 %v675, %v674
        %v691 = vpack.c.bf16 %v677, %v676
        %v692 = vpack.c.bf16 %v679, %v678
        %v693 = vpack.c.bf16 %v681, %v680
        %v694 = vpack.c.bf16 %v355, %v355
        %v696 = vsel %vm427, %v690, 0
        %v699 = vsel %vm427, %v691, 0
        %v702 = vsel %vm427, %v692, 0
        %v705 = vsel %vm427, %v693, 0
        %v708 = vsel %vm440, %v694, 0
        %710 = vmatprep.subr.bf16.mxu0 0
        %711 = vmatpush1.bf16.msra.mxu0 %v708
        %712 = vmatprep.subr.bf16.mxu0 0
        %713 = vmatpush1.bf16.msra.mxu0 0
        %714 = vmatprep.subr.bf16.mxu0 0
        %715 = vmatpush1.bf16.msra.mxu0 0
        %716 = vmatprep.subr.bf16.mxu0 0
        %717 = vmatpush1.bf16.msra.mxu0 0
        %718 = vmatprep.subr.bf16.mxu0 0
        %719 = vmatpush1.bf16.msra.mxu0 0
        %720 = vmatprep.subr.bf16.mxu0 0
        %721 = vmatpush1.bf16.msra.mxu0 0
        %722 = vmatprep.subr.bf16.mxu0 0
        %723 = vmatpush1.bf16.msra.mxu0 0
        %724 = vmatprep.subr.bf16.mxu0 0
        %725 = vmatpush1.bf16.msra.mxu0 0
        %726 = vmatprep.subr.bf16.mxu0 0
        %727 = vmatpush1.bf16.msra.mxu0 0
        %728 = vmatprep.subr.bf16.mxu0 0
        %729 = vmatpush1.bf16.msra.mxu0 0
        %730 = vmatprep.subr.bf16.mxu0 0
        %731 = vmatpush1.bf16.msra.mxu0 0
        %732 = vmatprep.subr.bf16.mxu0 0
        %733 = vmatpush1.bf16.msra.mxu0 0
        %734 = vmatprep.subr.bf16.mxu0 0
        %735 = vmatpush1.bf16.msra.mxu0 0
        %736 = vmatprep.subr.bf16.mxu0 0
        %737 = vmatpush1.bf16.msra.mxu0 0
        %738 = vmatprep.subr.bf16.mxu0 0
        %739 = vmatpush1.bf16.msra.mxu0 0
        %740 = vmatprep.subr.bf16.mxu0 0
        %741 = vmatpush1.bf16.msra.mxu0 0
        %742 = vmatprep.mubr.bf16.mxu0 0
        %743 = vmatmul.mubr.bf16.gmra.mrb[0].mxu0 %v696
        %v744 = vpop.f32.mrb[0].mxu0
        %v745 = vadd.f32 %v382, %v744
        %v746 = vpop.f32.mrb[0].mxu0
        %v747 = vpop.f32.mrb[0].mxu0
        %v748 = vadd.f32 %v383, %v747
        %v749 = vpop.f32.mrb[0].mxu0
        %750 = vmatprep.mubr.bf16.mxu0 0
        %751 = vmatmul.mubr.bf16.gmra.mrb[0].mxu0 %v699
        %v752 = vpop.f32.mrb[0].mxu0
        %v753 = vadd.f32 %v384, %v752
        %v754 = vpop.f32.mrb[0].mxu0
        %v755 = vpop.f32.mrb[0].mxu0
        %v756 = vadd.f32 %v385, %v755
        %v757 = vpop.f32.mrb[0].mxu0
        %758 = vmatprep.mubr.bf16.mxu0 0
        %759 = vmatmul.mubr.bf16.gmra.mrb[0].mxu0 %v702
        %v760 = vpop.f32.mrb[0].mxu0
        %v761 = vadd.f32 %v386, %v760
        %v762 = vpop.f32.mrb[0].mxu0
        %v763 = vpop.f32.mrb[0].mxu0
        %v764 = vadd.f32 %v387, %v763
        %v765 = vpop.f32.mrb[0].mxu0
        %766 = vmatprep.mubr.bf16.mxu0 0
        %767 = vmatmul.mubr.bf16.gmra.mrb[0].mxu0 %v705
        %v768 = vpop.f32.mrb[0].mxu0
        %v769 = vadd.f32 %v388, %v768
        %v770 = vpop.f32.mrb[0].mxu0
        %v771 = vpop.f32.mrb[0].mxu0
        %v772 = vadd.f32 %v389, %v771
        %v773 = vpop.f32.mrb[0].mxu0
        %774 = vdwg.mxu0
        %v775 = vsel %vm509, %v745, -inf
        %776 = vmax.xlane.f32.xlu0 %v775
        %v777 = vpop.xlane.xlu0 %776
        %v778 = vsel %vm509, %v748, -inf
        %779 = vmax.xlane.f32.xlu0 %v778
        %v780 = vpop.xlane.xlu0 %779
        %v781 = vsel %vm509, %v753, -inf
        %782 = vmax.xlane.f32.xlu0 %v781
        %v783 = vpop.xlane.xlu0 %782
        %v784 = vsel %vm509, %v756, -inf
        %785 = vmax.xlane.f32.xlu0 %v784
        %v786 = vpop.xlane.xlu0 %785
        %v787 = vsel %vm509, %v761, -inf
        %788 = vmax.xlane.f32.xlu0 %v787
        %v789 = vpop.xlane.xlu0 %788
        %v790 = vsel %vm509, %v764, -inf
        %791 = vmax.xlane.f32.xlu0 %v790
        %v792 = vpop.xlane.xlu0 %791
        %v793 = vsel %vm509, %v769, -inf
        %794 = vmax.xlane.f32.xlu0 %v793
        %v795 = vpop.xlane.xlu0 %794
        %v796 = vsel %vm509, %v772, -inf
        %797 = vmax.xlane.f32.xlu0 %v796
        %v798 = vpop.xlane.xlu0 %797
        %v799 = vsub.f32 %v745, %v777
        %v800 = vsub.f32 %v748, %v780
        %v801 = vsub.f32 %v753, %v783
        %v802 = vsub.f32 %v756, %v786
        %v803 = vsub.f32 %v761, %v789
        %v804 = vsub.f32 %v764, %v792
        %v805 = vsub.f32 %v769, %v795
        %v806 = vsub.f32 %v772, %v798
        %v807 = vmul.f32 %v799, 1.442695
        %v808 = vpow.pop %v807
        %v809 = vmul.f32 %v800, 1.442695
        %v810 = vpow.pop %v809
        %v811 = vmul.f32 %v801, 1.442695
        %v812 = vpow.pop %v811
        %v813 = vmul.f32 %v802, 1.442695
        %v814 = vpow.pop %v813
        %v815 = vmul.f32 %v803, 1.442695
        %v816 = vpow.pop %v815
        %v817 = vmul.f32 %v804, 1.442695
        %v818 = vpow.pop %v817
        %v819 = vmul.f32 %v805, 1.442695
        %v820 = vpow.pop %v819
        %v821 = vmul.f32 %v806, 1.442695
        %v822 = vpow.pop %v821
        %v823 = vsel %vm509, %v808, 0.0
        %824 = vadd.xlane.f32.xlu0 %v823
        %v825 = vpop.xlane.xlu0 %824
        %v826 = vsel %vm509, %v810, 0.0
        %827 = vadd.xlane.f32.xlu0 %v826
        %v828 = vpop.xlane.xlu0 %827
        %v829 = vsel %vm509, %v812, 0.0
        %830 = vadd.xlane.f32.xlu0 %v829
        %v831 = vpop.xlane.xlu0 %830
        %v832 = vsel %vm509, %v814, 0.0
        %833 = vadd.xlane.f32.xlu0 %v832
        %v834 = vpop.xlane.xlu0 %833
        %v835 = vsel %vm509, %v816, 0.0
        %836 = vadd.xlane.f32.xlu0 %v835
        %v837 = vpop.xlane.xlu0 %836
        %v838 = vsel %vm509, %v818, 0.0
        %839 = vadd.xlane.f32.xlu0 %v838
        %v840 = vpop.xlane.xlu0 %839
        %v841 = vsel %vm509, %v820, 0.0
        %842 = vadd.xlane.f32.xlu0 %v841
        %v843 = vpop.xlane.xlu0 %842
        %v844 = vsel %vm509, %v822, 0.0
        %845 = vadd.xlane.f32.xlu0 %v844
        %v846 = vpop.xlane.xlu0 %845
        %v847 = vrcp.pop %v825
        %v848 = vrcp.pop %v828
        %v849 = vrcp.pop %v831
        %v850 = vrcp.pop %v834
        %v851 = vrcp.pop %v837
        %v852 = vrcp.pop %v840
        %v853 = vrcp.pop %v843
        %v854 = vrcp.pop %v846
        %v855 = vmul.f32 %v808, %v847
        %v856 = vmul.f32 %v810, %v848
        %v857 = vmul.f32 %v812, %v849
        %v858 = vmul.f32 %v814, %v850
        %v859 = vmul.f32 %v816, %v851
        %v860 = vmul.f32 %v818, %v852
        %v861 = vmul.f32 %v820, %v853
        %v862 = vmul.f32 %v822, %v854
        %v863 = vpack.c.bf16 %v371, %v371
        %v864 = vpack.c.bf16 %v856, %v855
        %v865 = vpack.c.bf16 %v858, %v857
        %v866 = vpack.c.bf16 %v860, %v859
        %v867 = vpack.c.bf16 %v862, %v861
        %v869 = vsel %vm509, %v863, 0
        %v872 = vsel %vm509, %v864, 0
        %v875 = vsel %vm509, %v865, 0
        %v878 = vsel %vm509, %v866, 0
        %v881 = vsel %vm509, %v867, 0
        %883 = vmatprep.subr.bf16.mxu0 0
        %884 = vmatpush1.bf16.xpose.msra.mxu0 %v872
        %885 = vmatprep.subr.bf16.mxu0 0
        %886 = vmatpush1.bf16.xpose.msra.mxu0 %v875
        %887 = vmatprep.subr.bf16.mxu0 0
        %888 = vmatpush1.bf16.xpose.msra.mxu0 %v878
        %889 = vmatprep.subr.bf16.mxu0 0
        %890 = vmatpush1.bf16.xpose.msra.mxu0 %v881
        %891 = vmatprep.subr.bf16.mxu0 0
        %892 = vmatpush1.bf16.xpose.msra.mxu0 0
        %893 = vmatprep.subr.bf16.mxu0 0
        %894 = vmatpush1.bf16.xpose.msra.mxu0 0
        %895 = vmatprep.subr.bf16.mxu0 0
        %896 = vmatpush1.bf16.xpose.msra.mxu0 0
        %897 = vmatprep.subr.bf16.mxu0 0
        %898 = vmatpush1.bf16.xpose.msra.mxu0 0
        %899 = vmatprep.subr.bf16.mxu0 0
        %900 = vmatpush1.bf16.xpose.msra.mxu0 0
        %901 = vmatprep.subr.bf16.mxu0 0
        %902 = vmatpush1.bf16.xpose.msra.mxu0 0
        %903 = vmatprep.subr.bf16.mxu0 0
        %904 = vmatpush1.bf16.xpose.msra.mxu0 0
        %905 = vmatprep.subr.bf16.mxu0 0
        %906 = vmatpush1.bf16.xpose.msra.mxu0 0
        %907 = vmatprep.subr.bf16.mxu0 0
        %908 = vmatpush1.bf16.xpose.msra.mxu0 0
        %909 = vmatprep.subr.bf16.mxu0 0
        %910 = vmatpush1.bf16.xpose.msra.mxu0 0
        %911 = vmatprep.subr.bf16.mxu0 0
        %912 = vmatpush1.bf16.xpose.msra.mxu0 0
        %913 = vmatprep.subr.bf16.mxu0 0
        %914 = vmatpush1.bf16.xpose.msra.mxu0 0
        %915 = vmatprep.mubr.bf16.mxu0 0
        %916 = vmatmul.mubr.bf16.gmra.mrb[0].mxu0 %v869
        %v917 = vpop.f32.mrb[0].mxu0
        %v918 = vadd.f32 0.0, %v917
        %v919 = vpop.f32.mrb[0].mxu0
        %v920 = vpop.f32.mrb[0].mxu0
        %v921 = vpop.f32.mrb[0].mxu0
        %922 = vdwg.mxu0
        %923 = vxpose.xlu0.b32.start [1/16] %v344, 128
        %924 = vxpose.xlu0.b32.cont [2/16] 0.0, 128
        %925 = vxpose.xlu0.b32.cont [3/16] 0.0, 128
        %926 = vxpose.xlu0.b32.cont [4/16] 0.0, 128
        %927 = vxpose.xlu0.b32.cont [5/16] 0.0, 128
        %928 = vxpose.xlu0.b32.cont [6/16] 0.0, 128
        %929 = vxpose.xlu0.b32.cont [7/16] 0.0, 128
        %930 = vxpose.xlu0.b32.cont [8/16] 0.0, 128
        %931 = vxpose.xlu0.b32.cont [9/16] 0.0, 128
        %932 = vxpose.xlu0.b32.cont [10/16] 0.0, 128
        %933 = vxpose.xlu0.b32.cont [11/16] 0.0, 128
        %934 = vxpose.xlu0.b32.cont [12/16] 0.0, 128
        %935 = vxpose.xlu0.b32.cont [13/16] 0.0, 128
        %936 = vxpose.xlu0.b32.cont [14/16] 0.0, 128
        %937 = vxpose.xlu0.b32.cont [15/16] 0.0, 128
        %938 = vxpose.xlu0.b32.end [16/16] 0.0, 128
        %v939 = vpop.trf.xlu0
        %v940 = vpop.trf.xlu0
        %v941 = vpop.trf.xlu0
        %v942 = vpop.trf.xlu0
        %v943 = vpop.trf.xlu0
        %v944 = vpop.trf.xlu0
        %v945 = vpop.trf.xlu0
        %v946 = vpop.trf.xlu0
        %v947 = vpop.trf.xlu0
        %v948 = vpop.trf.xlu0
        %v949 = vpop.trf.xlu0
        %v950 = vpop.trf.xlu0
        %v951 = vpop.trf.xlu0
        %v952 = vpop.trf.xlu0
        %v953 = vpop.trf.xlu0
        %v954 = vpop.trf.xlu0
        %v955 = vpack.c.bf16 %v940, %v939
        %v956 = vpack.c.bf16 %v942, %v941
        %v957 = vpack.c.bf16 %v944, %v943
        %v958 = vpack.c.bf16 %v946, %v945
        %v959 = vpack.c.bf16 %v360, %v360
        %v961 = vsel %vm427, %v955, 0
        %v964 = vsel %vm427, %v956, 0
        %v967 = vsel %vm427, %v957, 0
        %v970 = vsel %vm427, %v958, 0
        %v973 = vsel %vm440, %v959, 0
        %975 = vmatprep.subr.bf16.mxu0 0
        %976 = vmatpush1.bf16.msra.mxu0 %v973
        %977 = vmatprep.subr.bf16.mxu0 0
        %978 = vmatpush1.bf16.msra.mxu0 0
        %979 = vmatprep.subr.bf16.mxu0 0
        %980 = vmatpush1.bf16.msra.mxu0 0
        %981 = vmatprep.subr.bf16.mxu0 0
        %982 = vmatpush1.bf16.msra.mxu0 0
        %983 = vmatprep.subr.bf16.mxu0 0
        %984 = vmatpush1.bf16.msra.mxu0 0
        %985 = vmatprep.subr.bf16.mxu0 0
        %986 = vmatpush1.bf16.msra.mxu0 0
        %987 = vmatprep.subr.bf16.mxu0 0
        %988 = vmatpush1.bf16.msra.mxu0 0
        %989 = vmatprep.subr.bf16.mxu0 0
        %990 = vmatpush1.bf16.msra.mxu0 0
        %991 = vmatprep.subr.bf16.mxu0 0
        %992 = vmatpush1.bf16.msra.mxu0 0
        %993 = vmatprep.subr.bf16.mxu0 0
        %994 = vmatpush1.bf16.msra.mxu0 0
        %995 = vmatprep.subr.bf16.mxu0 0
        %996 = vmatpush1.bf16.msra.mxu0 0
        %997 = vmatprep.subr.bf16.mxu0 0
        %998 = vmatpush1.bf16.msra.mxu0 0
        %999 = vmatprep.subr.bf16.mxu0 0
        %1000 = vmatpush1.bf16.msra.mxu0 0
        %1001 = vmatprep.subr.bf16.mxu0 0
        %1002 = vmatpush1.bf16.msra.mxu0 0
        %1003 = vmatprep.subr.bf16.mxu0 0
        %1004 = vmatpush1.bf16.msra.mxu0 0
        %1005 = vmatprep.subr.bf16.mxu0 0
        %1006 = vmatpush1.bf16.msra.mxu0 0
        %1007 = vmatprep.mubr.bf16.mxu0 0
        %1008 = vmatmul.mubr.bf16.gmra.mrb[0].mxu0 %v961
        %v1009 = vpop.f32.mrb[0].mxu0
        %v1010 = vadd.f32 %v382, %v1009
        %v1011 = vpop.f32.mrb[0].mxu0
        %v1012 = vpop.f32.mrb[0].mxu0
        %v1013 = vadd.f32 %v383, %v1012
        %v1014 = vpop.f32.mrb[0].mxu0
        %1015 = vmatprep.mubr.bf16.mxu0 0
        %1016 = vmatmul.mubr.bf16.gmra.mrb[0].mxu0 %v964
        %v1017 = vpop.f32.mrb[0].mxu0
        %v1018 = vadd.f32 %v384, %v1017
        %v1019 = vpop.f32.mrb[0].mxu0
        %v1020 = vpop.f32.mrb[0].mxu0
        %v1021 = vadd.f32 %v385, %v1020
        %v1022 = vpop.f32.mrb[0].mxu0
        %1023 = vmatprep.mubr.bf16.mxu0 0
        %1024 = vmatmul.mubr.bf16.gmra.mrb[0].mxu0 %v967
        %v1025 = vpop.f32.mrb[0].mxu0
        %v1026 = vadd.f32 %v386, %v1025
        %v1027 = vpop.f32.mrb[0].mxu0
        %v1028 = vpop.f32.mrb[0].mxu0
        %v1029 = vadd.f32 %v387, %v1028
        %v1030 = vpop.f32.mrb[0].mxu0
        %1031 = vmatprep.mubr.bf16.mxu0 0
        %1032 = vmatmul.mubr.bf16.gmra.mrb[0].mxu0 %v970
        %v1033 = vpop.f32.mrb[0].mxu0
        %v1034 = vadd.f32 %v388, %v1033
        %v1035 = vpop.f32.mrb[0].mxu0
        %v1036 = vpop.f32.mrb[0].mxu0
        %v1037 = vadd.f32 %v389, %v1036
        %v1038 = vpop.f32.mrb[0].mxu0
        %1039 = vdwg.mxu0
        %v1040 = vsel %vm509, %v1010, -inf
        %1041 = vmax.xlane.f32.xlu0 %v1040
        %v1042 = vpop.xlane.xlu0 %1041
        %v1043 = vsel %vm509, %v1013, -inf
        %1044 = vmax.xlane.f32.xlu0 %v1043
        %v1045 = vpop.xlane.xlu0 %1044
        %v1046 = vsel %vm509, %v1018, -inf
        %1047 = vmax.xlane.f32.xlu0 %v1046
        %v1048 = vpop.xlane.xlu0 %1047
        %v1049 = vsel %vm509, %v1021, -inf
        %1050 = vmax.xlane.f32.xlu0 %v1049
        %v1051 = vpop.xlane.xlu0 %1050
        %v1052 = vsel %vm509, %v1026, -inf
        %1053 = vmax.xlane.f32.xlu0 %v1052
        %v1054 = vpop.xlane.xlu0 %1053
        %v1055 = vsel %vm509, %v1029, -inf
        %1056 = vmax.xlane.f32.xlu0 %v1055
        %v1057 = vpop.xlane.xlu0 %1056
        %v1058 = vsel %vm509, %v1034, -inf
        %1059 = vmax.xlane.f32.xlu0 %v1058
        %v1060 = vpop.xlane.xlu0 %1059
        %v1061 = vsel %vm509, %v1037, -inf
        %1062 = vmax.xlane.f32.xlu0 %v1061
        %v1063 = vpop.xlane.xlu0 %1062
        %v1064 = vsub.f32 %v1010, %v1042
        %v1065 = vsub.f32 %v1013, %v1045
        %v1066 = vsub.f32 %v1018, %v1048
        %v1067 = vsub.f32 %v1021, %v1051
        %v1068 = vsub.f32 %v1026, %v1054
        %v1069 = vsub.f32 %v1029, %v1057
        %v1070 = vsub.f32 %v1034, %v1060
        %v1071 = vsub.f32 %v1037, %v1063
        %v1072 = vmul.f32 %v1064, 1.442695
        %v1073 = vpow.pop %v1072
        %v1074 = vmul.f32 %v1065, 1.442695
        %v1075 = vpow.pop %v1074
        %v1076 = vmul.f32 %v1066, 1.442695
        %v1077 = vpow.pop %v1076
        %v1078 = vmul.f32 %v1067, 1.442695
        %v1079 = vpow.pop %v1078
        %v1080 = vmul.f32 %v1068, 1.442695
        %v1081 = vpow.pop %v1080
        %v1082 = vmul.f32 %v1069, 1.442695
        %v1083 = vpow.pop %v1082
        %v1084 = vmul.f32 %v1070, 1.442695
        %v1085 = vpow.pop %v1084
        %v1086 = vmul.f32 %v1071, 1.442695
        %v1087 = vpow.pop %v1086
        %v1088 = vsel %vm509, %v1073, 0.0
        %1089 = vadd.xlane.f32.xlu0 %v1088
        %v1090 = vpop.xlane.xlu0 %1089
        %v1091 = vsel %vm509, %v1075, 0.0
        %1092 = vadd.xlane.f32.xlu0 %v1091
        %v1093 = vpop.xlane.xlu0 %1092
        %v1094 = vsel %vm509, %v1077, 0.0
        %1095 = vadd.xlane.f32.xlu0 %v1094
        %v1096 = vpop.xlane.xlu0 %1095
        %v1097 = vsel %vm509, %v1079, 0.0
        %1098 = vadd.xlane.f32.xlu0 %v1097
        %v1099 = vpop.xlane.xlu0 %1098
        %v1100 = vsel %vm509, %v1081, 0.0
        %1101 = vadd.xlane.f32.xlu0 %v1100
        %v1102 = vpop.xlane.xlu0 %1101
        %v1103 = vsel %vm509, %v1083, 0.0
        %1104 = vadd.xlane.f32.xlu0 %v1103
        %v1105 = vpop.xlane.xlu0 %1104
        %v1106 = vsel %vm509, %v1085, 0.0
        %1107 = vadd.xlane.f32.xlu0 %v1106
        %v1108 = vpop.xlane.xlu0 %1107
        %v1109 = vsel %vm509, %v1087, 0.0
        %1110 = vadd.xlane.f32.xlu0 %v1109
        %v1111 = vpop.xlane.xlu0 %1110
        %v1112 = vrcp.pop %v1090
        %v1113 = vrcp.pop %v1093
        %v1114 = vrcp.pop %v1096
        %v1115 = vrcp.pop %v1099
        %v1116 = vrcp.pop %v1102
        %v1117 = vrcp.pop %v1105
        %v1118 = vrcp.pop %v1108
        %v1119 = vrcp.pop %v1111
        %v1120 = vmul.f32 %v1073, %v1112
        %v1121 = vmul.f32 %v1075, %v1113
        %v1122 = vmul.f32 %v1077, %v1114
        %v1123 = vmul.f32 %v1079, %v1115
        %v1124 = vmul.f32 %v1081, %v1116
        %v1125 = vmul.f32 %v1083, %v1117
        %v1126 = vmul.f32 %v1085, %v1118
        %v1127 = vmul.f32 %v1087, %v1119
        %v1128 = vpack.c.bf16 %v376, %v376
        %v1129 = vpack.c.bf16 %v1121, %v1120
        %v1130 = vpack.c.bf16 %v1123, %v1122
        %v1131 = vpack.c.bf16 %v1125, %v1124
        %v1132 = vpack.c.bf16 %v1127, %v1126
        %v1134 = vsel %vm509, %v1128, 0
        %v1137 = vsel %vm509, %v1129, 0
        %v1140 = vsel %vm509, %v1130, 0
        %v1143 = vsel %vm509, %v1131, 0
        %v1146 = vsel %vm509, %v1132, 0
        %1148 = vmatprep.subr.bf16.mxu0 0
        %1149 = vmatpush1.bf16.xpose.msra.mxu0 %v1137
        %1150 = vmatprep.subr.bf16.mxu0 0
        %1151 = vmatpush1.bf16.xpose.msra.mxu0 %v1140
        %1152 = vmatprep.subr.bf16.mxu0 0
        %1153 = vmatpush1.bf16.xpose.msra.mxu0 %v1143
        %1154 = vmatprep.subr.bf16.mxu0 0
        %1155 = vmatpush1.bf16.xpose.msra.mxu0 %v1146
        %1156 = vmatprep.subr.bf16.mxu0 0
        %1157 = vmatpush1.bf16.xpose.msra.mxu0 0
        %1158 = vmatprep.subr.bf16.mxu0 0
        %1159 = vmatpush1.bf16.xpose.msra.mxu0 0
        %1160 = vmatprep.subr.bf16.mxu0 0
        %1161 = vmatpush1.bf16.xpose.msra.mxu0 0
        %1162 = vmatprep.subr.bf16.mxu0 0
        %1163 = vmatpush1.bf16.xpose.msra.mxu0 0
        %1164 = vmatprep.subr.bf16.mxu0 0
        %1165 = vmatpush1.bf16.xpose.msra.mxu0 0
        %1166 = vmatprep.subr.bf16.mxu0 0
        %1167 = vmatpush1.bf16.xpose.msra.mxu0 0
        %1168 = vmatprep.subr.bf16.mxu0 0
        %1169 = vmatpush1.bf16.xpose.msra.mxu0 0
        %1170 = vmatprep.subr.bf16.mxu0 0
        %1171 = vmatpush1.bf16.xpose.msra.mxu0 0
        %1172 = vmatprep.subr.bf16.mxu0 0
        %1173 = vmatpush1.bf16.xpose.msra.mxu0 0
        %1174 = vmatprep.subr.bf16.mxu0 0
        %1175 = vmatpush1.bf16.xpose.msra.mxu0 0
        %1176 = vmatprep.subr.bf16.mxu0 0
        %1177 = vmatpush1.bf16.xpose.msra.mxu0 0
        %1178 = vmatprep.subr.bf16.mxu0 0
        %1179 = vmatpush1.bf16.xpose.msra.mxu0 0
        %1180 = vmatprep.mubr.bf16.mxu0 0
        %1181 = vmatmul.mubr.bf16.gmra.mrb[0].mxu0 %v1134
        %v1182 = vpop.f32.mrb[0].mxu0
        %v1183 = vadd.f32 0.0, %v1182
        %v1184 = vpop.f32.mrb[0].mxu0
        %v1185 = vpop.f32.mrb[0].mxu0
        %v1186 = vpop.f32.mrb[0].mxu0
        %1187 = vdwg.mxu0
        %1188 = vxpose.xlu0.b32.start [1/16] %v347, 128
        %1189 = vxpose.xlu0.b32.cont [2/16] 0.0, 128
        %1190 = vxpose.xlu0.b32.cont [3/16] 0.0, 128
        %1191 = vxpose.xlu0.b32.cont [4/16] 0.0, 128
        %1192 = vxpose.xlu0.b32.cont [5/16] 0.0, 128
        %1193 = vxpose.xlu0.b32.cont [6/16] 0.0, 128
        %1194 = vxpose.xlu0.b32.cont [7/16] 0.0, 128
        %1195 = vxpose.xlu0.b32.cont [8/16] 0.0, 128
        %1196 = vxpose.xlu0.b32.cont [9/16] 0.0, 128
        %1197 = vxpose.xlu0.b32.cont [10/16] 0.0, 128
        %1198 = vxpose.xlu0.b32.cont [11/16] 0.0, 128
        %1199 = vxpose.xlu0.b32.cont [12/16] 0.0, 128
        %1200 = vxpose.xlu0.b32.cont [13/16] 0.0, 128
        %1201 = vxpose.xlu0.b32.cont [14/16] 0.0, 128
        %1202 = vxpose.xlu0.b32.cont [15/16] 0.0, 128
        %1203 = vxpose.xlu0.b32.end [16/16] 0.0, 128
        %v1204 = vpop.trf.xlu0
        %v1205 = vpop.trf.xlu0
        %v1206 = vpop.trf.xlu0
        %v1207 = vpop.trf.xlu0
        %v1208 = vpop.trf.xlu0
        %v1209 = vpop.trf.xlu0
        %v1210 = vpop.trf.xlu0
        %v1211 = vpop.trf.xlu0
        %v1212 = vpop.trf.xlu0
        %v1213 = vpop.trf.xlu0
        %v1214 = vpop.trf.xlu0
        %v1215 = vpop.trf.xlu0
        %v1216 = vpop.trf.xlu0
        %v1217 = vpop.trf.xlu0
        %v1218 = vpop.trf.xlu0
        %v1219 = vpop.trf.xlu0
        %v1220 = vpack.c.bf16 %v1205, %v1204
        %v1221 = vpack.c.bf16 %v1207, %v1206
        %v1222 = vpack.c.bf16 %v1209, %v1208
        %v1223 = vpack.c.bf16 %v1211, %v1210
        %v1224 = vpack.c.bf16 %v363, %v363
        %v1226 = vsel %vm427, %v1220, 0
        %v1229 = vsel %vm427, %v1221, 0
        %v1232 = vsel %vm427, %v1222, 0
        %v1235 = vsel %vm427, %v1223, 0
        %v1238 = vsel %vm440, %v1224, 0
        %1240 = vmatprep.subr.bf16.mxu0 0
        %1241 = vmatpush1.bf16.msra.mxu0 %v1238
        %1242 = vmatprep.subr.bf16.mxu0 0
        %1243 = vmatpush1.bf16.msra.mxu0 0
        %1244 = vmatprep.subr.bf16.mxu0 0
        %1245 = vmatpush1.bf16.msra.mxu0 0
        %1246 = vmatprep.subr.bf16.mxu0 0
        %1247 = vmatpush1.bf16.msra.mxu0 0
        %1248 = vmatprep.subr.bf16.mxu0 0
        %1249 = vmatpush1.bf16.msra.mxu0 0
        %1250 = vmatprep.subr.bf16.mxu0 0
        %1251 = vmatpush1.bf16.msra.mxu0 0
        %1252 = vmatprep.subr.bf16.mxu0 0
        %1253 = vmatpush1.bf16.msra.mxu0 0
        %1254 = vmatprep.subr.bf16.mxu0 0
        %1255 = vmatpush1.bf16.msra.mxu0 0
        %1256 = vmatprep.subr.bf16.mxu0 0
        %1257 = vmatpush1.bf16.msra.mxu0 0
        %1258 = vmatprep.subr.bf16.mxu0 0
        %1259 = vmatpush1.bf16.msra.mxu0 0
        %1260 = vmatprep.subr.bf16.mxu0 0
        %1261 = vmatpush1.bf16.msra.mxu0 0
        %1262 = vmatprep.subr.bf16.mxu0 0
        %1263 = vmatpush1.bf16.msra.mxu0 0
        %1264 = vmatprep.subr.bf16.mxu0 0
        %1265 = vmatpush1.bf16.msra.mxu0 0
        %1266 = vmatprep.subr.bf16.mxu0 0
        %1267 = vmatpush1.bf16.msra.mxu0 0
        %1268 = vmatprep.subr.bf16.mxu0 0
        %1269 = vmatpush1.bf16.msra.mxu0 0
        %1270 = vmatprep.subr.bf16.mxu0 0
        %1271 = vmatpush1.bf16.msra.mxu0 0
        %1272 = vmatprep.mubr.bf16.mxu0 0
        %1273 = vmatmul.mubr.bf16.gmra.mrb[0].mxu0 %v1226
        %v1274 = vpop.f32.mrb[0].mxu0
        %v1275 = vadd.f32 %v382, %v1274
        %v1276 = vpop.f32.mrb[0].mxu0
        %v1277 = vpop.f32.mrb[0].mxu0
        %v1278 = vadd.f32 %v383, %v1277
        %v1279 = vpop.f32.mrb[0].mxu0
        %1280 = vmatprep.mubr.bf16.mxu0 0
        %1281 = vmatmul.mubr.bf16.gmra.mrb[0].mxu0 %v1229
        %v1282 = vpop.f32.mrb[0].mxu0
        %v1283 = vadd.f32 %v384, %v1282
        %v1284 = vpop.f32.mrb[0].mxu0
        %v1285 = vpop.f32.mrb[0].mxu0
        %v1286 = vadd.f32 %v385, %v1285
        %v1287 = vpop.f32.mrb[0].mxu0
        %1288 = vmatprep.mubr.bf16.mxu0 0
        %1289 = vmatmul.mubr.bf16.gmra.mrb[0].mxu0 %v1232
        %v1290 = vpop.f32.mrb[0].mxu0
        %v1291 = vadd.f32 %v386, %v1290
        %v1292 = vpop.f32.mrb[0].mxu0
        %v1293 = vpop.f32.mrb[0].mxu0
        %v1294 = vadd.f32 %v387, %v1293
        %v1295 = vpop.f32.mrb[0].mxu0
        %1296 = vmatprep.mubr.bf16.mxu0 0
        %1297 = vmatmul.mubr.bf16.gmra.mrb[0].mxu0 %v1235
        %v1298 = vpop.f32.mrb[0].mxu0
        %v1299 = vadd.f32 %v388, %v1298
        %v1300 = vpop.f32.mrb[0].mxu0
        %v1301 = vpop.f32.mrb[0].mxu0
        %v1302 = vadd.f32 %v389, %v1301
        %v1303 = vpop.f32.mrb[0].mxu0
        %1304 = vdwg.mxu0
        %v1305 = vsel %vm509, %v1275, -inf
        %1306 = vmax.xlane.f32.xlu0 %v1305
        %v1307 = vpop.xlane.xlu0 %1306
        %v1308 = vsel %vm509, %v1278, -inf
        %1309 = vmax.xlane.f32.xlu0 %v1308
        %v1310 = vpop.xlane.xlu0 %1309
        %v1311 = vsel %vm509, %v1283, -inf
        %1312 = vmax.xlane.f32.xlu0 %v1311
        %v1313 = vpop.xlane.xlu0 %1312
        %v1314 = vsel %vm509, %v1286, -inf
        %1315 = vmax.xlane.f32.xlu0 %v1314
        %v1316 = vpop.xlane.xlu0 %1315
        %v1317 = vsel %vm509, %v1291, -inf
        %1318 = vmax.xlane.f32.xlu0 %v1317
        %v1319 = vpop.xlane.xlu0 %1318
        %v1320 = vsel %vm509, %v1294, -inf
        %1321 = vmax.xlane.f32.xlu0 %v1320
        %v1322 = vpop.xlane.xlu0 %1321
        %v1323 = vsel %vm509, %v1299, -inf
        %1324 = vmax.xlane.f32.xlu0 %v1323
        %v1325 = vpop.xlane.xlu0 %1324
        %v1326 = vsel %vm509, %v1302, -inf
        %1327 = vmax.xlane.f32.xlu0 %v1326
        %v1328 = vpop.xlane.xlu0 %1327
        %v1329 = vsub.f32 %v1275, %v1307
        %v1330 = vsub.f32 %v1278, %v1310
        %v1331 = vsub.f32 %v1283, %v1313
        %v1332 = vsub.f32 %v1286, %v1316
        %v1333 = vsub.f32 %v1291, %v1319
        %v1334 = vsub.f32 %v1294, %v1322
        %v1335 = vsub.f32 %v1299, %v1325
        %v1336 = vsub.f32 %v1302, %v1328
        %v1337 = vmul.f32 %v1329, 1.442695
        %v1338 = vpow.pop %v1337
        %v1339 = vmul.f32 %v1330, 1.442695
        %v1340 = vpow.pop %v1339
        %v1341 = vmul.f32 %v1331, 1.442695
        %v1342 = vpow.pop %v1341
        %v1343 = vmul.f32 %v1332, 1.442695
        %v1344 = vpow.pop %v1343
        %v1345 = vmul.f32 %v1333, 1.442695
        %v1346 = vpow.pop %v1345
        %v1347 = vmul.f32 %v1334, 1.442695
        %v1348 = vpow.pop %v1347
        %v1349 = vmul.f32 %v1335, 1.442695
        %v1350 = vpow.pop %v1349
        %v1351 = vmul.f32 %v1336, 1.442695
        %v1352 = vpow.pop %v1351
        %v1353 = vsel %vm509, %v1338, 0.0
        %1354 = vadd.xlane.f32.xlu0 %v1353
        %v1355 = vpop.xlane.xlu0 %1354
        %v1356 = vsel %vm509, %v1340, 0.0
        %1357 = vadd.xlane.f32.xlu0 %v1356
        %v1358 = vpop.xlane.xlu0 %1357
        %v1359 = vsel %vm509, %v1342, 0.0
        %1360 = vadd.xlane.f32.xlu0 %v1359
        %v1361 = vpop.xlane.xlu0 %1360
        %v1362 = vsel %vm509, %v1344, 0.0
        %1363 = vadd.xlane.f32.xlu0 %v1362
        %v1364 = vpop.xlane.xlu0 %1363
        %v1365 = vsel %vm509, %v1346, 0.0
        %1366 = vadd.xlane.f32.xlu0 %v1365
        %v1367 = vpop.xlane.xlu0 %1366
        %v1368 = vsel %vm509, %v1348, 0.0
        %1369 = vadd.xlane.f32.xlu0 %v1368
        %v1370 = vpop.xlane.xlu0 %1369
        %v1371 = vsel %vm509, %v1350, 0.0
        %1372 = vadd.xlane.f32.xlu0 %v1371
        %v1373 = vpop.xlane.xlu0 %1372
        %v1374 = vsel %vm509, %v1352, 0.0
        %1375 = vadd.xlane.f32.xlu0 %v1374
        %v1376 = vpop.xlane.xlu0 %1375
        %v1377 = vrcp.pop %v1355
        %v1378 = vrcp.pop %v1358
        %v1379 = vrcp.pop %v1361
        %v1380 = vrcp.pop %v1364
        %v1381 = vrcp.pop %v1367
        %v1382 = vrcp.pop %v1370
        %v1383 = vrcp.pop %v1373
        %v1384 = vrcp.pop %v1376
        %v1385 = vmul.f32 %v1338, %v1377
        %v1386 = vmul.f32 %v1340, %v1378
        %v1387 = vmul.f32 %v1342, %v1379
        %v1388 = vmul.f32 %v1344, %v1380
        %v1389 = vmul.f32 %v1346, %v1381
        %v1390 = vmul.f32 %v1348, %v1382
        %v1391 = vmul.f32 %v1350, %v1383
        %v1392 = vmul.f32 %v1352, %v1384
        %v1393 = vpack.c.bf16 %v379, %v379
        %v1394 = vpack.c.bf16 %v1386, %v1385
        %v1395 = vpack.c.bf16 %v1388, %v1387
        %v1396 = vpack.c.bf16 %v1390, %v1389
        %v1397 = vpack.c.bf16 %v1392, %v1391
        %v1399 = vsel %vm509, %v1393, 0
        %v1402 = vsel %vm509, %v1394, 0
        %v1405 = vsel %vm509, %v1395, 0
        %v1408 = vsel %vm509, %v1396, 0
        %v1411 = vsel %vm509, %v1397, 0
        %1413 = vmatprep.subr.bf16.mxu0 0
        %1414 = vmatpush1.bf16.xpose.msra.mxu0 %v1402
        %1415 = vmatprep.subr.bf16.mxu0 0
        %1416 = vmatpush1.bf16.xpose.msra.mxu0 %v1405
        %1417 = vmatprep.subr.bf16.mxu0 0
        %1418 = vmatpush1.bf16.xpose.msra.mxu0 %v1408
        %1419 = vmatprep.subr.bf16.mxu0 0
        %1420 = vmatpush1.bf16.xpose.msra.mxu0 %v1411
        %1421 = vmatprep.subr.bf16.mxu0 0
        %1422 = vmatpush1.bf16.xpose.msra.mxu0 0
        %1423 = vmatprep.subr.bf16.mxu0 0
        %1424 = vmatpush1.bf16.xpose.msra.mxu0 0
        %1425 = vmatprep.subr.bf16.mxu0 0
        %1426 = vmatpush1.bf16.xpose.msra.mxu0 0
        %1427 = vmatprep.subr.bf16.mxu0 0
        %1428 = vmatpush1.bf16.xpose.msra.mxu0 0
        %1429 = vmatprep.subr.bf16.mxu0 0
        %1430 = vmatpush1.bf16.xpose.msra.mxu0 0
        %1431 = vmatprep.subr.bf16.mxu0 0
        %1432 = vmatpush1.bf16.xpose.msra.mxu0 0
        %1433 = vmatprep.subr.bf16.mxu0 0
        %1434 = vmatpush1.bf16.xpose.msra.mxu0 0
        %1435 = vmatprep.subr.bf16.mxu0 0
        %1436 = vmatpush1.bf16.xpose.msra.mxu0 0
        %1437 = vmatprep.subr.bf16.mxu0 0
        %1438 = vmatpush1.bf16.xpose.msra.mxu0 0
        %1439 = vmatprep.subr.bf16.mxu0 0
        %1440 = vmatpush1.bf16.xpose.msra.mxu0 0
        %1441 = vmatprep.subr.bf16.mxu0 0
        %1442 = vmatpush1.bf16.xpose.msra.mxu0 0
        %1443 = vmatprep.subr.bf16.mxu0 0
        %1444 = vmatpush1.bf16.xpose.msra.mxu0 0
        %1445 = vmatprep.mubr.bf16.mxu0 0
        %1446 = vmatmul.mubr.bf16.gmra.mrb[0].mxu0 %v1399
        %v1447 = vpop.f32.mrb[0].mxu0
        %v1448 = vadd.f32 0.0, %v1447
        %v1449 = vpop.f32.mrb[0].mxu0
        %v1450 = vpop.f32.mrb[0].mxu0
        %v1451 = vpop.f32.mrb[0].mxu0
        %1452 = vdwg.mxu0
        %v1453 = vld [vmem:[%s2] sm:$0xf]
        %v1454 = vld [vmem:[%s2 + $0x4] sm:$0xf]
        %v1455 = vld [vmem:[%s2 + $0x8] sm:$0xf]
        %v1456 = vld [vmem:[%s2 + $0xc] sm:$0xf]
        %v1457 = vpack.c.bf16 %v918, %v653
        %v1458 = vpack.c.bf16 %v1448, %v1183
        %v1459 = vld [vmem:[%s3] sm:$0xff]
        %v1460 = vld [vmem:[%s3 + $0x8] sm:$0xff]
        %v1461 = vld [vmem:[%s3 + $0x10] sm:$0xff]
        %v1462 = vld [vmem:[%s3 + $0x18] sm:$0xff]
        %1464 = vset.pattern.permute.xlu0 0
        %1465 = vperm.xlu0 %1464, %v1459
        %v1466 = vpop.permute.xlu0 %1465
        %1469 = vset.pattern.permute.xlu0 0
        %1470 = vperm.xlu0 %1469, %v1460
        %v1471 = vpop.permute.xlu0 %1470
        %1474 = vset.pattern.permute.xlu0 0
        %1475 = vperm.xlu0 %1474, %v1461
        %v1476 = vpop.permute.xlu0 %1475
        %1479 = vset.pattern.permute.xlu0 0
        %1480 = vperm.xlu0 %1479, %v1462
        %v1481 = vpop.permute.xlu0 %1480
        %v1487 = vunpack.c.l.b16 %v1453
        %v1488 = vunpack.c.l.b16 %v1454
        %v1489 = vunpack.c.l.b16 %v1455
        %v1490 = vunpack.c.l.b16 %v1456
        %v1491 = vpack.c.b16 %v1488, %v1487
        %v1492 = vpack.c.b16 %v1490, %v1489
        %v1494 = vsel %vm282, %v1491, 0
        %v1497 = vsel %vm282, %v1492, 0
        %1499 = vmatprep.subr.bf16.mxu0 0
        %1500 = vmatpush1.bf16.msra.mxu0 %v1457
        %1501 = vmatprep.subr.bf16.mxu0 0
        %1502 = vmatpush1.bf16.msra.mxu0 %v1458
        %1503 = vmatprep.subr.bf16.mxu0 0
        %1504 = vmatpush1.bf16.msra.mxu0 0
        %1505 = vmatprep.subr.bf16.mxu0 0
        %1506 = vmatpush1.bf16.msra.mxu0 0
        %1507 = vmatprep.subr.bf16.mxu0 0
        %1508 = vmatpush1.bf16.msra.mxu0 0
        %1509 = vmatprep.subr.bf16.mxu0 0
        %1510 = vmatpush1.bf16.msra.mxu0 0
        %1511 = vmatprep.subr.bf16.mxu0 0
        %1512 = vmatpush1.bf16.msra.mxu0 0
        %1513 = vmatprep.subr.bf16.mxu0 0
        %1514 = vmatpush1.bf16.msra.mxu0 0
        %1515 = vmatprep.subr.bf16.mxu0 0
        %1516 = vmatpush1.bf16.msra.mxu0 0
        %1517 = vmatprep.subr.bf16.mxu0 0
        %1518 = vmatpush1.bf16.msra.mxu0 0
        %1519 = vmatprep.subr.bf16.mxu0 0
        %1520 = vmatpush1.bf16.msra.mxu0 0
        %1521 = vmatprep.subr.bf16.mxu0 0
        %1522 = vmatpush1.bf16.msra.mxu0 0
        %1523 = vmatprep.subr.bf16.mxu0 0
        %1524 = vmatpush1.bf16.msra.mxu0 0
        %1525 = vmatprep.subr.bf16.mxu0 0
        %1526 = vmatpush1.bf16.msra.mxu0 0
        %1527 = vmatprep.subr.bf16.mxu0 0
        %1528 = vmatpush1.bf16.msra.mxu0 0
        %1529 = vmatprep.subr.bf16.mxu0 0
        %1530 = vmatpush1.bf16.msra.mxu0 0
        %1531 = vmatprep.mubr.bf16.mxu0 0
        %1532 = vmatmul.mubr.bf16.gmra.mrb[0].mxu0 %v1494
        %v1533 = vpop.f32.mrb[0].mxu0
        %v1534 = vadd.f32 %v1466, %v1533
        %v1535 = vpop.f32.mrb[0].mxu0
        %v1536 = vpop.f32.mrb[0].mxu0
        %v1537 = vadd.f32 %v1471, %v1536
        %v1538 = vpop.f32.mrb[0].mxu0
        %1539 = vmatprep.mubr.bf16.mxu0 0
        %1540 = vmatmul.mubr.bf16.gmra.mrb[0].mxu0 %v1497
        %v1541 = vpop.f32.mrb[0].mxu0
        %v1542 = vadd.f32 %v1476, %v1541
        %v1543 = vpop.f32.mrb[0].mxu0
        %v1544 = vpop.f32.mrb[0].mxu0
        %v1545 = vadd.f32 %v1481, %v1544
        %v1546 = vpop.f32.mrb[0].mxu0
        %1547 = vdwg.mxu0
        %1548 = vst.msk [vmem:[%s217] sm:$0xff] %vm509, %v1534
        %1549 = vst.msk [vmem:[%s217 + $0x8] sm:$0xff] %vm509, %v1537
        %1550 = vst.msk [vmem:[%s217 + $0x10] sm:$0xff] %vm509, %v1542
        %1551 = vst.msk [vmem:[%s217 + $0x18] sm:$0xff] %vm509, %v1545
        %s1552 = sand.u32 %s137, 1
        %s1553 = scalar_lea.sflag [#allocation3], %s1552
        %s1554 = sand.u32 %s137, 1
        %s1555 = smul.addr %s1554, 32
        %s1556 = scalar_lea.vmem [#allocation2], %s1555
        // Predicated region
        $region41: #{tpu_custom_call.1} parent=39 // pred_check
          %p1557 = pneg %p147
        $region42: #{tpu_custom_call.1} parent=39 // pred_check_branch
          %1559 = sbr.rel (%p1557) target = $region44
        $region43: #{tpu_custom_call.1} parent=39 // pred_region
          %s1561 = ssub.s32 512, 512
          %1562 = vsyncadd %s1553, %s1561
          %s1563 = smul.addr %s19, 4
          %s1564 = smul.addr %s1563, 128
          %s1565 = scalar_lea.hbm %s5, %s1564
          %s1566 = sshll.u32 %s1556, 4
          %s1567 = int_to_ptr.vmem [resolvable:$true] %s1566
          %1572 = dma.vmem_to_hbm [thread:$0]  %s1567, 512, %s1565, %s1553, 128, 128, 8
        $region44: #{tpu_custom_call.1} parent=39 // pred_fallthru
          _
      $region40: #{tpu_custom_call.1} parent=5 // pred_fallthru
        _
      %p1573 = scmp.le.s32.totalorder 2, %s14
      // Predicated region
      $region45: #{tpu_custom_call.1} parent=5 // pred_check
        %p1574 = pneg %p1573
      $region46: #{tpu_custom_call.1} parent=5 // pred_check_branch
        %1576 = sbr.rel (%p1574) target = $region48
      $region47: #{tpu_custom_call.1} parent=5 // pred_region
        %s1577 = ssub.s32 %s14, 2
        // Predicated region
        $region49: #{tpu_custom_call.1} parent=47 // pred_check
          %p1578 = pneg %p153
        $region50: #{tpu_custom_call.1} parent=47 // pred_check_branch
          %1580 = sbr.rel (%p1578) target = $region52
        $region51: #{tpu_custom_call.1} parent=47 // pred_region
          %s1581 = sand.u32 %s138, 1
          %s1582 = scalar_lea.sflag [#allocation3], %s1581
          %s1583 = sand.u32 %s138, 1
          %s1584 = smul.addr %s1583, 32
          %s1585 = scalar_lea.vmem [#allocation2], %s1584
          %1586 = dma.done %s1582, 512
        $region52: #{tpu_custom_call.1} parent=47 // pred_fallthru
          _
      $region48: #{tpu_custom_call.1} parent=5 // pred_fallthru
        _
    $region6: #{tpu_custom_call.1} parent=1 // loop_footer
      %s18 = sadd.s32 1, %s14
    $region7: #{tpu_custom_call.1} parent=1 // loop_footer_branch
      %13 = sbr.rel target = $region3
    $region8: #{tpu_custom_call.1} parent=1 // loop_exit
      _
    %1587 = vsyncpa [#allocation3], 1
    %s1588 = scalar_lea.sflag [#allocation3], 1
    %1589 = vsyncpa %s1588, 1

</llo_original>
